<compile_context>
chip_gen: v5e
topology: v5e:2x2
jax: 0.10.0
libtpu: 0.0.40
codegen_flags: <defaults>
</compile_context>

<pallas_src>
import functools

import jax
import jax.numpy as jnp
from jax.experimental import pallas as pl
from jax.experimental.pallas import tpu as pltpu

LANE = 128


def _round_up(n, m):
    return (n + m - 1) // m * m


def lstm_kernel(xp_ref, whh_ref, h_ref, c_ref, *, unroll, light_sigmoid):
    """One grid iteration = T_CHUNK LSTM timesteps for one batch block.

    xp_ref : (T_CHUNK, Bb, 4*Hp)  precomputed x @ W_ih + b (gate-padded, time-major)
    whh_ref: (Hp, 4*Hp)           hidden->gates weights (transposed, gate-padded)
    h_ref  : (Bb, Hp)             hidden state (resident across the time grid axis)
    c_ref  : (Bb, Hp)             cell state   (resident across the time grid axis)
    """
    @pl.when(pl.program_id(1) == 0)
    def _init():
        h_ref[...] = jnp.zeros_like(h_ref)
        c_ref[...] = jnp.zeros_like(c_ref)

    hp = h_ref.shape[-1]
    t_chunk = xp_ref.shape[0]

    if light_sigmoid:
        # 1 EUP op (tanh) + 2 VPU ops instead of exp + reciprocal.
        def sigmoid(v):
            return 0.5 * (jnp.tanh(0.5 * v) + 1.0)
    else:
        sigmoid = jax.nn.sigmoid

    def step(s, carry):
        h, c = carry
        h_mm = h.astype(whh_ref.dtype)
        xp_s = xp_ref[s]                       # (Bb, 4*Hp), stream dtype

        def gate_pre(k):
            # Per-gate lane-aligned dot; splitting lets the scheduler overlap
            # gate k's EUP work with gate k+1's MXU pushes.
            return (xp_s[:, k * hp:(k + 1) * hp].astype(jnp.float32)
                    + jnp.dot(h_mm, whh_ref[:, k * hp:(k + 1) * hp],
                              preferred_element_type=jnp.float32))

        # PyTorch gate order: i, f, g, o.
        i_g = sigmoid(gate_pre(0))
        f_g = sigmoid(gate_pre(1))
        g_g = jnp.tanh(gate_pre(2))
        o_g = sigmoid(gate_pre(3))
        c = f_g * c + i_g * g_g
        h = o_g * jnp.tanh(c)
        return h, c

    h, c = jax.lax.fori_loop(0, t_chunk, step, (h_ref[...], c_ref[...]),
                             unroll=unroll)
    h_ref[...] = h
    c_ref[...] = c


def _pad_gate_cols(w_t, H, Hp):
    """(rows, 4H) -> (rows, 4*Hp); gate k occupies columns [k*Hp, k*Hp + H)."""
    rows = w_t.shape[0]
    w4 = w_t.reshape(rows, 4, H)
    out = jnp.zeros((rows, 4, Hp), w_t.dtype).at[:, :, :H].set(w4)
    return out.reshape(rows, 4 * Hp)


@functools.partial(
    jax.jit,
    static_argnames=("t_chunk", "b_block", "compute_dtype", "stream_dtype",
                     "unroll", "light_sigmoid", "whh_single_buffer",
                     "vmem_limit_bytes"))
def lstm_forward(x, params, *, t_chunk=None, b_block=None,
                 compute_dtype="float32", stream_dtype=None, unroll=None,
                 light_sigmoid=False, whh_single_buffer=True,
                 vmem_limit_bytes=None):
    """x: (B, T, D) float32.  Returns (out, (h_n, c_n)) like the PyTorch module.

    compute_dtype : MXU operand dtype for W_hh / h (bf16 recommended on real TPUs;
                    accumulation and gate math always stay f32).
    stream_dtype  : dtype used to stream the precomputed pre-activations
                    (bf16 halves the dominant HBM/VMEM traffic).
    """
    w_ih, w_hh, b_ih, b_hh, w_fc, b_fc = params
    B, T, D = x.shape
    H = w_hh.shape[1]
    Hp = _round_up(H, LANE)
    mm_dtype = jnp.dtype(compute_dtype)
    st_dtype = mm_dtype if stream_dtype is None else jnp.dtype(stream_dtype)

    if t_chunk is None:
        # Amortize the ~0.35us/grid-step overhead; VMEM accounting below keeps
        # the double-buffered xp block in budget.
        t_chunk = max(1, min(32, T))
    if b_block is None:
        # b_block is the only MXU row fill per step (>=128 on v5e, >=256 on
        # v6e/v7x).  For large batches split in two so the "parallel" batch
        # axis maps one block per v7x TensorCore.
        b_block = B // 2 if (B >= 512 and B % 2 == 0 and (B // 2) % 8 == 0) else B
    assert B % b_block == 0
    # Sublane packing: f32 needs 8-row, 16-bit stream dtypes need 16-row blocks
    # (or the full batch dimension).
    min_rows = 16 if st_dtype.itemsize == 2 else 8
    assert b_block == B or b_block % min_rows == 0

    # ---- kernel-layout weights (gate-padded so every gate is lane-aligned).
    # Padded rows/cols of W_hh and the folded bias are exactly zero: with
    # (h, c) = 0 in the padded lanes, gates there stay 0 and the state stays 0,
    # which is what makes both the lane padding and the time front-padding
    # exact (end-to-end tested in __main__ with t_chunk > T).
    w_ih_t = _pad_gate_cols(w_ih.T, H, Hp)                          # (D, 4*Hp)
    w_hh_t = jnp.zeros((Hp, 4 * Hp), jnp.float32)
    w_hh_t = w_hh_t.at[:H, :].set(_pad_gate_cols(w_hh.T, H, Hp))    # (Hp, 4*Hp)
    b = _pad_gate_cols((b_ih + b_hh)[None, :], H, Hp)[0]            # (4*Hp,)

    # ---- hoisted time-parallel input projection: one big f32 MXU matmul ----
    xp = jnp.einsum("btd,dg->tbg", x, w_ih_t,
                    preferred_element_type=jnp.float32) + b[None, None, :]
    xp = xp.astype(st_dtype)                                        # stream dtype

    # Front-pad time so it divides t_chunk (zero pre-activations keep h=c=0).
    n_chunks = pl.cdiv(T, t_chunk)
    T_pad = n_chunks * t_chunk
    if T_pad != T:
        xp = jnp.concatenate(
            [jnp.zeros((T_pad - T,) + xp.shape[1:], xp.dtype), xp], axis=0)

    # ---- unroll factor: full only while live gate values fit in the vreg file.
    if unroll is None:
        live_bytes = b_block * 4 * Hp * 4        # one step's f32 gate values
        unroll = t_chunk if live_bytes <= (64 << 10) else 2
    unroll = max(1, min(int(unroll), t_chunk))

    # ---- explicit VMEM accounting -> scoped limit (defaults are 16/32 MiB).
    whh_bufs = 1 if whh_single_buffer else 2
    if vmem_limit_bytes is None:
        need = (2 * t_chunk * b_block * 4 * Hp * st_dtype.itemsize   # xp, 2 bufs
                + whh_bufs * Hp * 4 * Hp * mm_dtype.itemsize         # W_hh
                + 2 * 2 * b_block * Hp * 4)                          # h, c
        vmem_limit_bytes = int(min(max(need * 3 // 2, 32 << 20), 128 << 20))

    whh_spec = pl.BlockSpec(
        (Hp, 4 * Hp), lambda bb, tt: (0, 0),
        # Grid-invariant operand: single buffer (saves Hp*4Hp bytes of VMEM).
        pipeline_mode=pl.Buffered(1) if whh_single_buffer else None)

    grid = (B // b_block, T_pad // t_chunk)

    kernel = functools.partial(lstm_kernel, unroll=unroll,
                               light_sigmoid=light_sigmoid)

    h_pad, c_pad = pl.pallas_call(
        kernel,
        out_shape=(jax.ShapeDtypeStruct((B, Hp), jnp.float32),
                   jax.ShapeDtypeStruct((B, Hp), jnp.float32)),
        grid_spec=pltpu.PrefetchScalarGridSpec(
            num_scalar_prefetch=0,
            grid=grid,
            in_specs=[
                pl.BlockSpec((t_chunk, b_block, 4 * Hp),
                             lambda bb, tt: (tt, bb, 0)),
                whh_spec,
            ],
            out_specs=(
                pl.BlockSpec((b_block, Hp), lambda bb, tt: (bb, 0)),
                pl.BlockSpec((b_block, Hp), lambda bb, tt: (bb, 0)),
            ),
        ),
        compiler_params=pltpu.CompilerParams(
            # batch blocks are independent recurrences (megacore-parallel on
            # v7x); the time axis is a true recurrence.
            dimension_semantics=("parallel", "arbitrary"),
            vmem_limit_bytes=vmem_limit_bytes),
    )(xp, w_hh_t.astype(mm_dtype))

    h_n = h_pad[:, :H]
    c_n = c_pad[:, :H]
    # fc head on the last hidden state: trivial (B,H)x(H,O), handled by XLA so
    # the kernel carries no resident fc weights and no lane-sparse (B, O) store.
    out = h_n @ w_fc.T + b_fc
    # PyTorch returns hidden states with a leading n_layers=1 axis.
    return out, (h_n[None, :, :], c_n[None, :, :])


def make_params(key, input_size, hidden_dim, output_size):
    """PyTorch-layout params with U(-1/sqrt(H), 1/sqrt(H)) init."""
    k = 1.0 / jnp.sqrt(jnp.float32(hidden_dim))
    keys = jax.random.split(key, 6)
    w_ih = jax.random.uniform(keys[0], (4 * hidden_dim, input_size), jnp.float32, -k, k)
    w_hh = jax.random.uniform(keys[1], (4 * hidden_dim, hidden_dim), jnp.float32, -k, k)
    b_ih = jax.random.uniform(keys[2], (4 * hidden_dim,), jnp.float32, -k, k)
    b_hh = jax.random.uniform(keys[3], (4 * hidden_dim,), jnp.float32, -k, k)
    w_fc = jax.random.uniform(keys[4], (output_size, hidden_dim), jnp.float32, -k, k)
    b_fc = jax.random.uniform(keys[5], (output_size,), jnp.float32, -k, k)
    return (w_ih, w_hh, b_ih, b_hh, w_fc, b_fc)


def lstm_reference(x, params):
    """Pure-JAX reference (lax.scan) matching the PyTorch module."""
    w_ih, w_hh, b_ih, b_hh, w_fc, b_fc = params
    B = x.shape[0]
    H = w_hh.shape[1]

    def step(carry, x_t):
        h, c = carry
        gates = x_t @ w_ih.T + h @ w_hh.T + b_ih + b_hh
        i = jax.nn.sigmoid(gates[:, 0 * H:1 * H])
        f = jax.nn.sigmoid(gates[:, 1 * H:2 * H])
        g = jnp.tanh(gates[:, 2 * H:3 * H])
        o = jax.nn.sigmoid(gates[:, 3 * H:4 * H])
        c = f * c + i * g
        h = o * jnp.tanh(c)
        return (h, c), None

    h0 = jnp.zeros((B, H), jnp.float32)
    c0 = jnp.zeros((B, H), jnp.float32)
    (h_n, c_n), _ = jax.lax.scan(step, (h0, c0), jnp.transpose(x, (1, 0, 2)))
    out = h_n @ w_fc.T + b_fc
    return out, (h_n[None], c_n[None])


if __name__ == "__main__":
    B, T, D, H, O = 8, 8, 16, 32, 4   # batch, seq, input_size, hidden_dim, output_size

    key = jax.random.PRNGKey(0)
    k_x, k_p, k_x2 = jax.random.split(key, 3)
    x = jax.random.normal(k_x, (B, T, D), jnp.float32)
    params = make_params(k_p, D, H, O)

    out_ref, (h_ref, c_ref) = lstm_reference(x, params)

    # 1) f32 path, t_chunk == T (no time padding).
    out, (h_n, c_n) = lstm_forward(x, params, t_chunk=8)
    jax.block_until_ready((out, h_n, c_n))
    assert out.shape == (B, O) and h_n.shape == (1, B, H) and c_n.shape == (1, B, H)
    assert jnp.allclose(out, out_ref, atol=1e-4, rtol=1e-4)
    assert jnp.allclose(h_n, h_ref, atol=1e-4, rtol=1e-4)
    assert jnp.allclose(c_n, c_ref, atol=1e-4, rtol=1e-4)

    # 2) batch-blocked grid + time front-padding (t_chunk > T) + light-sigmoid;
    #    exercises the zero-padding fixed point and the per-block recurrence.
    B2 = 16
    x2 = jax.random.normal(k_x2, (B2, T, D), jnp.float32)
    out2_ref, (h2_ref, c2_ref) = lstm_reference(x2, params)
    out2, (h2, c2) = lstm_forward(x2, params, t_chunk=16, b_block=8,
                                  light_sigmoid=True)
    jax.block_until_ready((out2, h2, c2))
    assert jnp.allclose(out2, out2_ref, atol=1e-4, rtol=1e-4)
    assert jnp.allclose(h2, h2_ref, atol=1e-4, rtol=1e-4)
    assert jnp.allclose(c2, c2_ref, atol=1e-4, rtol=1e-4)

    # 3) bf16-streamed pre-activations (no bf16 dots: gate math / state / MXU
    #    operands stay f32, only the xp HBM stream is narrowed).
    out_bf, (h_bf, c_bf) = lstm_forward(x, params, t_chunk=8,
                                        stream_dtype="bfloat16")
    jax.block_until_ready((out_bf, h_bf, c_bf))
    assert jnp.allclose(out_bf, out_ref, atol=5e-2, rtol=5e-2)
    assert jnp.allclose(h_bf, h_ref, atol=5e-2, rtol=5e-2)
    assert jnp.allclose(c_bf, c_ref, atol=5e-2, rtol=5e-2)

    # TODO(synk): enable compute_dtype="bfloat16" (bf16 W_hh MXU operands) on
    # real TPU hardware; not exercised here because non-Mosaic backends reject
    # BF16xBF16=F32 dots.
    print("KERNEL_OK")
</pallas_src>

<mosaic_0001>
module attributes {stable_mosaic.version = 11 : i64} {
  func.func @lstm_kernel(%arg0: i32, %arg1: i32, %arg2: memref<8x8x512xf32, #tpu.memory_space<vmem>>, %arg3: memref<128x512xf32, #tpu.memory_space<vmem>>, %arg4: memref<8x128xf32, #tpu.memory_space<vmem>>, %arg5: memref<8x128xf32, #tpu.memory_space<vmem>>) attributes {dimension_semantics = [#tpu.dimension_semantics<parallel>, #tpu.dimension_semantics<arbitrary>], iteration_bounds = array<i64: 1, 1>, scalar_prefetch = 0 : i64, scratch_operands = 0 : i64, tpu.core_type = #tpu.core_type<tc>, window_params = [{transform_indices = @transform_0, window_bounds = array<i64: 8, 8, 512>}, {pipeline_mode = #tpu.pipeline_mode<synchronous>, transform_indices = @transform_1, window_bounds = array<i64: 128, 512>}, {transform_indices = @transform_2, window_bounds = array<i64: 8, 128>}, {transform_indices = @transform_3, window_bounds = array<i64: 8, 128>}]} {
    %c0_i32 = arith.constant 0 : i32
    %0 = arith.cmpi eq, %arg1, %c0_i32 : i32
    %1 = arith.extui %0 : i1 to i32
    %c0_i32_0 = arith.constant 0 : i32
    %2 = arith.cmpi ne, %1, %c0_i32_0 : i32
    scf.if %2 {
      %cst_141 = arith.constant 0.000000e+00 : f32
      %327 = vector.broadcast %cst_141 : f32 to vector<8x128xf32>
      %c0_142 = arith.constant 0 : index
      %c0_143 = arith.constant 0 : index
      %328 = vector.load %arg4[%c0_142, %c0_143] : memref<8x128xf32, #tpu.memory_space<vmem>>, vector<8x128xf32>
      tpu.vector_store %arg4[%c0_142, %c0_143], %327 {strides = array<i32>} : memref<8x128xf32, #tpu.memory_space<vmem>>, vector<8x128xf32>,
      %cst_144 = arith.constant 0.000000e+00 : f32
      %329 = vector.broadcast %cst_144 : f32 to vector<8x128xf32>
      %c0_145 = arith.constant 0 : index
      %c0_146 = arith.constant 0 : index
      %330 = vector.load %arg5[%c0_145, %c0_146] : memref<8x128xf32, #tpu.memory_space<vmem>>, vector<8x128xf32>
      tpu.vector_store %arg5[%c0_145, %c0_146], %329 {strides = array<i32>} : memref<8x128xf32, #tpu.memory_space<vmem>>, vector<8x128xf32>,
    } else {
    }
    %c0 = arith.constant 0 : index
    %c0_1 = arith.constant 0 : index
    %3 = vector.load %arg4[%c0, %c0_1] : memref<8x128xf32, #tpu.memory_space<vmem>>, vector<8x128xf32>
    %c0_2 = arith.constant 0 : index
    %c0_3 = arith.constant 0 : index
    %4 = vector.load %arg5[%c0_2, %c0_3] : memref<8x128xf32, #tpu.memory_space<vmem>>, vector<8x128xf32>
    %c0_i32_4 = arith.constant 0 : i32
    %5 = arith.index_cast %c0_i32_4 : i32 to index
    %c0_5 = arith.constant 0 : index
    %c0_6 = arith.constant 0 : index
    %6 = vector.load %arg2[%5, %c0_5, %c0_6] : memref<8x8x512xf32, #tpu.memory_space<vmem>>, vector<1x8x512xf32>
    %7 = vector.shape_cast %6 : vector<1x8x512xf32> to vector<8x512xf32>
    %8 = vector.extract_strided_slice %7 {offsets = [0, 0], sizes = [8, 128], strides = [1, 1]} : vector<8x512xf32> to vector<8x128xf32>
    %c0_7 = arith.constant 0 : index
    %c0_8 = arith.constant 0 : index
    %9 = vector.load %arg3[%c0_7, %c0_8] : memref<128x512xf32, #tpu.memory_space<vmem>>, vector<128x128xf32>
    %cst = arith.constant dense<0.000000e+00> : vector<8x128xf32>
    %10 = tpu.matmul %3, %9, %cst {dimension_numbers = #tpu.dot_dimension_numbers<[1], [0], [0], [1], [0, 0, 1, 1], [], []>} : vector<8x128xf32>, vector<128x128xf32>, vector<8x128xf32> -> vector<8x128xf32>
    %11 = arith.addf %8, %10 : vector<8x128xf32>
    %12 = arith.negf %11 : vector<8x128xf32>
    %13 = math.exp %12 : vector<8x128xf32>
    %cst_9 = arith.constant 1.000000e+00 : f32
    %14 = vector.broadcast %cst_9 : f32 to vector<8x128xf32>
    %15 = arith.addf %14, %13 : vector<8x128xf32>
    %16 = arith.divf %14, %15 : vector<8x128xf32>
    %17 = vector.extract_strided_slice %7 {offsets = [0, 128], sizes = [8, 128], strides = [1, 1]} : vector<8x512xf32> to vector<8x128xf32>
    %c0_10 = arith.constant 0 : index
    %c128 = arith.constant 128 : index
    %18 = vector.load %arg3[%c0_10, %c128] : memref<128x512xf32, #tpu.memory_space<vmem>>, vector<128x128xf32>
    %cst_11 = arith.constant dense<0.000000e+00> : vector<8x128xf32>
    %19 = tpu.matmul %3, %18, %cst_11 {dimension_numbers = #tpu.dot_dimension_numbers<[1], [0], [0], [1], [0, 0, 1, 1], [], []>} : vector<8x128xf32>, vector<128x128xf32>, vector<8x128xf32> -> vector<8x128xf32>
    %20 = arith.addf %17, %19 : vector<8x128xf32>
    %21 = arith.negf %20 : vector<8x128xf32>
    %22 = math.exp %21 : vector<8x128xf32>
    %cst_12 = arith.constant 1.000000e+00 : f32
    %23 = vector.broadcast %cst_12 : f32 to vector<8x128xf32>
    %24 = arith.addf %23, %22 : vector<8x128xf32>
    %25 = arith.divf %23, %24 : vector<8x128xf32>
    %26 = vector.extract_strided_slice %7 {offsets = [0, 256], sizes = [8, 128], strides = [1, 1]} : vector<8x512xf32> to vector<8x128xf32>
    %c0_13 = arith.constant 0 : index
    %c256 = arith.constant 256 : index
    %27 = vector.load %arg3[%c0_13, %c256] : memref<128x512xf32, #tpu.memory_space<vmem>>, vector<128x128xf32>
    %cst_14 = arith.constant dense<0.000000e+00> : vector<8x128xf32>
    %28 = tpu.matmul %3, %27, %cst_14 {dimension_numbers = #tpu.dot_dimension_numbers<[1], [0], [0], [1], [0, 0, 1, 1], [], []>} : vector<8x128xf32>, vector<128x128xf32>, vector<8x128xf32> -> vector<8x128xf32>
    %29 = arith.addf %26, %28 : vector<8x128xf32>
    %30 = math.tanh %29 : vector<8x128xf32>
    %31 = vector.extract_strided_slice %7 {offsets = [0, 384], sizes = [8, 128], strides = [1, 1]} : vector<8x512xf32> to vector<8x128xf32>
    %c0_15 = arith.constant 0 : index
    %c384 = arith.constant 384 : index
    %32 = vector.load %arg3[%c0_15, %c384] : memref<128x512xf32, #tpu.memory_space<vmem>>, vector<128x128xf32>
    %cst_16 = arith.constant dense<0.000000e+00> : vector<8x128xf32>
    %33 = tpu.matmul %3, %32, %cst_16 {dimension_numbers = #tpu.dot_dimension_numbers<[1], [0], [0], [1], [0, 0, 1, 1], [], []>} : vector<8x128xf32>, vector<128x128xf32>, vector<8x128xf32> -> vector<8x128xf32>
    %34 = arith.addf %31, %33 : vector<8x128xf32>
    %35 = arith.negf %34 : vector<8x128xf32>
    %36 = math.exp %35 : vector<8x128xf32>
    %cst_17 = arith.constant 1.000000e+00 : f32
    %37 = vector.broadcast %cst_17 : f32 to vector<8x128xf32>
    %38 = arith.addf %37, %36 : vector<8x128xf32>
    %39 = arith.divf %37, %38 : vector<8x128xf32>
    %40 = arith.mulf %25, %4 : vector<8x128xf32>
    %41 = arith.mulf %16, %30 : vector<8x128xf32>
    %42 = arith.addf %40, %41 : vector<8x128xf32>
    %43 = math.tanh %42 : vector<8x128xf32>
    %44 = arith.mulf %39, %43 : vector<8x128xf32>
    %c1_i32 = arith.constant 1 : i32
    %45 = arith.index_cast %c1_i32 : i32 to index
    %c0_18 = arith.constant 0 : index
    %c0_19 = arith.constant 0 : index
    %46 = vector.load %arg2[%45, %c0_18, %c0_19] : memref<8x8x512xf32, #tpu.memory_space<vmem>>, vector<1x8x512xf32>
    %47 = vector.shape_cast %46 : vector<1x8x512xf32> to vector<8x512xf32>
    %48 = vector.extract_strided_slice %47 {offsets = [0, 0], sizes = [8, 128], strides = [1, 1]} : vector<8x512xf32> to vector<8x128xf32>
    %c0_20 = arith.constant 0 : index
    %c0_21 = arith.constant 0 : index
    %49 = vector.load %arg3[%c0_20, %c0_21] : memref<128x512xf32, #tpu.memory_space<vmem>>, vector<128x128xf32>
    %cst_22 = arith.constant dense<0.000000e+00> : vector<8x128xf32>
    %50 = tpu.matmul %44, %49, %cst_22 {dimension_numbers = #tpu.dot_dimension_numbers<[1], [0], [0], [1], [0, 0, 1, 1], [], []>} : vector<8x128xf32>, vector<128x128xf32>, vector<8x128xf32> -> vector<8x128xf32>
    %51 = arith.addf %48, %50 : vector<8x128xf32>
    %52 = arith.negf %51 : vector<8x128xf32>
    %53 = math.exp %52 : vector<8x128xf32>
    %cst_23 = arith.constant 1.000000e+00 : f32
    %54 = vector.broadcast %cst_23 : f32 to vector<8x128xf32>
    %55 = arith.addf %54, %53 : vector<8x128xf32>
    %56 = arith.divf %54, %55 : vector<8x128xf32>
    %57 = vector.extract_strided_slice %47 {offsets = [0, 128], sizes = [8, 128], strides = [1, 1]} : vector<8x512xf32> to vector<8x128xf32>
    %c0_24 = arith.constant 0 : index
    %c128_25 = arith.constant 128 : index
    %58 = vector.load %arg3[%c0_24, %c128_25] : memref<128x512xf32, #tpu.memory_space<vmem>>, vector<128x128xf32>
    %cst_26 = arith.constant dense<0.000000e+00> : vector<8x128xf32>
    %59 = tpu.matmul %44, %58, %cst_26 {dimension_numbers = #tpu.dot_dimension_numbers<[1], [0], [0], [1], [0, 0, 1, 1], [], []>} : vector<8x128xf32>, vector<128x128xf32>, vector<8x128xf32> -> vector<8x128xf32>
    %60 = arith.addf %57, %59 : vector<8x128xf32>
    %61 = arith.negf %60 : vector<8x128xf32>
    %62 = math.exp %61 : vector<8x128xf32>
    %cst_27 = arith.constant 1.000000e+00 : f32
    %63 = vector.broadcast %cst_27 : f32 to vector<8x128xf32>
    %64 = arith.addf %63, %62 : vector<8x128xf32>
    %65 = arith.divf %63, %64 : vector<8x128xf32>
    %66 = vector.extract_strided_slice %47 {offsets = [0, 256], sizes = [8, 128], strides = [1, 1]} : vector<8x512xf32> to vector<8x128xf32>
    %c0_28 = arith.constant 0 : index
    %c256_29 = arith.constant 256 : index
    %67 = vector.load %arg3[%c0_28, %c256_29] : memref<128x512xf32, #tpu.memory_space<vmem>>, vector<128x128xf32>
    %cst_30 = arith.constant dense<0.000000e+00> : vector<8x128xf32>
    %68 = tpu.matmul %44, %67, %cst_30 {dimension_numbers = #tpu.dot_dimension_numbers<[1], [0], [0], [1], [0, 0, 1, 1], [], []>} : vector<8x128xf32>, vector<128x128xf32>, vector<8x128xf32> -> vector<8x128xf32>
    %69 = arith.addf %66, %68 : vector<8x128xf32>
    %70 = math.tanh %69 : vector<8x128xf32>
    %71 = vector.extract_strided_slice %47 {offsets = [0, 384], sizes = [8, 128], strides = [1, 1]} : vector<8x512xf32> to vector<8x128xf32>
    %c0_31 = arith.constant 0 : index
    %c384_32 = arith.constant 384 : index
    %72 = vector.load %arg3[%c0_31, %c384_32] : memref<128x512xf32, #tpu.memory_space<vmem>>, vector<128x128xf32>
    %cst_33 = arith.constant dense<0.000000e+00> : vector<8x128xf32>
    %73 = tpu.matmul %44, %72, %cst_33 {dimension_numbers = #tpu.dot_dimension_numbers<[1], [0], [0], [1], [0, 0, 1, 1], [], []>} : vector<8x128xf32>, vector<128x128xf32>, vector<8x128xf32> -> vector<8x128xf32>
    %74 = arith.addf %71, %73 : vector<8x128xf32>
    %75 = arith.negf %74 : vector<8x128xf32>
    %76 = math.exp %75 : vector<8x128xf32>
    %cst_34 = arith.constant 1.000000e+00 : f32
    %77 = vector.broadcast %cst_34 : f32 to vector<8x128xf32>
    %78 = arith.addf %77, %76 : vector<8x128xf32>
    %79 = arith.divf %77, %78 : vector<8x128xf32>
    %80 = arith.mulf %65, %42 : vector<8x128xf32>
    %81 = arith.mulf %56, %70 : vector<8x128xf32>
    %82 = arith.addf %80, %81 : vector<8x128xf32>
    %83 = math.tanh %82 : vector<8x128xf32>
    %84 = arith.mulf %79, %83 : vector<8x128xf32>
    %c2_i32 = arith.constant 2 : i32
    %85 = arith.index_cast %c2_i32 : i32 to index
    %c0_35 = arith.constant 0 : index
    %c0_36 = arith.constant 0 : index
    %86 = vector.load %arg2[%85, %c0_35, %c0_36] : memref<8x8x512xf32, #tpu.memory_space<vmem>>, vector<1x8x512xf32>
    %87 = vector.shape_cast %86 : vector<1x8x512xf32> to vector<8x512xf32>
    %88 = vector.extract_strided_slice %87 {offsets = [0, 0], sizes = [8, 128], strides = [1, 1]} : vector<8x512xf32> to vector<8x128xf32>
    %c0_37 = arith.constant 0 : index
    %c0_38 = arith.constant 0 : index
    %89 = vector.load %arg3[%c0_37, %c0_38] : memref<128x512xf32, #tpu.memory_space<vmem>>, vector<128x128xf32>
    %cst_39 = arith.constant dense<0.000000e+00> : vector<8x128xf32>
    %90 = tpu.matmul %84, %89, %cst_39 {dimension_numbers = #tpu.dot_dimension_numbers<[1], [0], [0], [1], [0, 0, 1, 1], [], []>} : vector<8x128xf32>, vector<128x128xf32>, vector<8x128xf32> -> vector<8x128xf32>
    %91 = arith.addf %88, %90 : vector<8x128xf32>
    %92 = arith.negf %91 : vector<8x128xf32>
    %93 = math.exp %92 : vector<8x128xf32>
    %cst_40 = arith.constant 1.000000e+00 : f32
    %94 = vector.broadcast %cst_40 : f32 to vector<8x128xf32>
    %95 = arith.addf %94, %93 : vector<8x128xf32>
    %96 = arith.divf %94, %95 : vector<8x128xf32>
    %97 = vector.extract_strided_slice %87 {offsets = [0, 128], sizes = [8, 128], strides = [1, 1]} : vector<8x512xf32> to vector<8x128xf32>
    %c0_41 = arith.constant 0 : index
    %c128_42 = arith.constant 128 : index
    %98 = vector.load %arg3[%c0_41, %c128_42] : memref<128x512xf32, #tpu.memory_space<vmem>>, vector<128x128xf32>
    %cst_43 = arith.constant dense<0.000000e+00> : vector<8x128xf32>
    %99 = tpu.matmul %84, %98, %cst_43 {dimension_numbers = #tpu.dot_dimension_numbers<[1], [0], [0], [1], [0, 0, 1, 1], [], []>} : vector<8x128xf32>, vector<128x128xf32>, vector<8x128xf32> -> vector<8x128xf32>
    %100 = arith.addf %97, %99 : vector<8x128xf32>
    %101 = arith.negf %100 : vector<8x128xf32>
    %102 = math.exp %101 : vector<8x128xf32>
    %cst_44 = arith.constant 1.000000e+00 : f32
    %103 = vector.broadcast %cst_44 : f32 to vector<8x128xf32>
    %104 = arith.addf %103, %102 : vector<8x128xf32>
    %105 = arith.divf %103, %104 : vector<8x128xf32>
    %106 = vector.extract_strided_slice %87 {offsets = [0, 256], sizes = [8, 128], strides = [1, 1]} : vector<8x512xf32> to vector<8x128xf32>
    %c0_45 = arith.constant 0 : index
    %c256_46 = arith.constant 256 : index
    %107 = vector.load %arg3[%c0_45, %c256_46] : memref<128x512xf32, #tpu.memory_space<vmem>>, vector<128x128xf32>
    %cst_47 = arith.constant dense<0.000000e+00> : vector<8x128xf32>
    %108 = tpu.matmul %84, %107, %cst_47 {dimension_numbers = #tpu.dot_dimension_numbers<[1], [0], [0], [1], [0, 0, 1, 1], [], []>} : vector<8x128xf32>, vector<128x128xf32>, vector<8x128xf32> -> vector<8x128xf32>
    %109 = arith.addf %106, %108 : vector<8x128xf32>
    %110 = math.tanh %109 : vector<8x128xf32>
    %111 = vector.extract_strided_slice %87 {offsets = [0, 384], sizes = [8, 128], strides = [1, 1]} : vector<8x512xf32> to vector<8x128xf32>
    %c0_48 = arith.constant 0 : index
    %c384_49 = arith.constant 384 : index
    %112 = vector.load %arg3[%c0_48, %c384_49] : memref<128x512xf32, #tpu.memory_space<vmem>>, vector<128x128xf32>
    %cst_50 = arith.constant dense<0.000000e+00> : vector<8x128xf32>
    %113 = tpu.matmul %84, %112, %cst_50 {dimension_numbers = #tpu.dot_dimension_numbers<[1], [0], [0], [1], [0, 0, 1, 1], [], []>} : vector<8x128xf32>, vector<128x128xf32>, vector<8x128xf32> -> vector<8x128xf32>
    %114 = arith.addf %111, %113 : vector<8x128xf32>
    %115 = arith.negf %114 : vector<8x128xf32>
    %116 = math.exp %115 : vector<8x128xf32>
    %cst_51 = arith.constant 1.000000e+00 : f32
    %117 = vector.broadcast %cst_51 : f32 to vector<8x128xf32>
    %118 = arith.addf %117, %116 : vector<8x128xf32>
    %119 = arith.divf %117, %118 : vector<8x128xf32>
    %120 = arith.mulf %105, %82 : vector<8x128xf32>
    %121 = arith.mulf %96, %110 : vector<8x128xf32>
    %122 = arith.addf %120, %121 : vector<8x128xf32>
    %123 = math.tanh %122 : vector<8x128xf32>
    %124 = arith.mulf %119, %123 : vector<8x128xf32>
    %c3_i32 = arith.constant 3 : i32
    %125 = arith.index_cast %c3_i32 : i32 to index
    %c0_52 = arith.constant 0 : index
    %c0_53 = arith.constant 0 : index
    %126 = vector.load %arg2[%125, %c0_52, %c0_53] : memref<8x8x512xf32, #tpu.memory_space<vmem>>, vector<1x8x512xf32>
    %127 = vector.shape_cast %126 : vector<1x8x512xf32> to vector<8x512xf32>
    %128 = vector.extract_strided_slice %127 {offsets = [0, 0], sizes = [8, 128], strides = [1, 1]} : vector<8x512xf32> to vector<8x128xf32>
    %c0_54 = arith.constant 0 : index
    %c0_55 = arith.constant 0 : index
    %129 = vector.load %arg3[%c0_54, %c0_55] : memref<128x512xf32, #tpu.memory_space<vmem>>, vector<128x128xf32>
    %cst_56 = arith.constant dense<0.000000e+00> : vector<8x128xf32>
    %130 = tpu.matmul %124, %129, %cst_56 {dimension_numbers = #tpu.dot_dimension_numbers<[1], [0], [0], [1], [0, 0, 1, 1], [], []>} : vector<8x128xf32>, vector<128x128xf32>, vector<8x128xf32> -> vector<8x128xf32>
    %131 = arith.addf %128, %130 : vector<8x128xf32>
    %132 = arith.negf %131 : vector<8x128xf32>
    %133 = math.exp %132 : vector<8x128xf32>
    %cst_57 = arith.constant 1.000000e+00 : f32
    %134 = vector.broadcast %cst_57 : f32 to vector<8x128xf32>
    %135 = arith.addf %134, %133 : vector<8x128xf32>
    %136 = arith.divf %134, %135 : vector<8x128xf32>
    %137 = vector.extract_strided_slice %127 {offsets = [0, 128], sizes = [8, 128], strides = [1, 1]} : vector<8x512xf32> to vector<8x128xf32>
    %c0_58 = arith.constant 0 : index
    %c128_59 = arith.constant 128 : index
    %138 = vector.load %arg3[%c0_58, %c128_59] : memref<128x512xf32, #tpu.memory_space<vmem>>, vector<128x128xf32>
    %cst_60 = arith.constant dense<0.000000e+00> : vector<8x128xf32>
    %139 = tpu.matmul %124, %138, %cst_60 {dimension_numbers = #tpu.dot_dimension_numbers<[1], [0], [0], [1], [0, 0, 1, 1], [], []>} : vector<8x128xf32>, vector<128x128xf32>, vector<8x128xf32> -> vector<8x128xf32>
    %140 = arith.addf %137, %139 : vector<8x128xf32>
    %141 = arith.negf %140 : vector<8x128xf32>
    %142 = math.exp %141 : vector<8x128xf32>
    %cst_61 = arith.constant 1.000000e+00 : f32
    %143 = vector.broadcast %cst_61 : f32 to vector<8x128xf32>
    %144 = arith.addf %143, %142 : vector<8x128xf32>
    %145 = arith.divf %143, %144 : vector<8x128xf32>
    %146 = vector.extract_strided_slice %127 {offsets = [0, 256], sizes = [8, 128], strides = [1, 1]} : vector<8x512xf32> to vector<8x128xf32>
    %c0_62 = arith.constant 0 : index
    %c256_63 = arith.constant 256 : index
    %147 = vector.load %arg3[%c0_62, %c256_63] : memref<128x512xf32, #tpu.memory_space<vmem>>, vector<128x128xf32>
    %cst_64 = arith.constant dense<0.000000e+00> : vector<8x128xf32>
    %148 = tpu.matmul %124, %147, %cst_64 {dimension_numbers = #tpu.dot_dimension_numbers<[1], [0], [0], [1], [0, 0, 1, 1], [], []>} : vector<8x128xf32>, vector<128x128xf32>, vector<8x128xf32> -> vector<8x128xf32>
    %149 = arith.addf %146, %148 : vector<8x128xf32>
    %150 = math.tanh %149 : vector<8x128xf32>
    %151 = vector.extract_strided_slice %127 {offsets = [0, 384], sizes = [8, 128], strides = [1, 1]} : vector<8x512xf32> to vector<8x128xf32>
    %c0_65 = arith.constant 0 : index
    %c384_66 = arith.constant 384 : index
    %152 = vector.load %arg3[%c0_65, %c384_66] : memref<128x512xf32, #tpu.memory_space<vmem>>, vector<128x128xf32>
    %cst_67 = arith.constant dense<0.000000e+00> : vector<8x128xf32>
    %153 = tpu.matmul %124, %152, %cst_67 {dimension_numbers = #tpu.dot_dimension_numbers<[1], [0], [0], [1], [0, 0, 1, 1], [], []>} : vector<8x128xf32>, vector<128x128xf32>, vector<8x128xf32> -> vector<8x128xf32>
    %154 = arith.addf %151, %153 : vector<8x128xf32>
    %155 = arith.negf %154 : vector<8x128xf32>
    %156 = math.exp %155 : vector<8x128xf32>
    %cst_68 = arith.constant 1.000000e+00 : f32
    %157 = vector.broadcast %cst_68 : f32 to vector<8x128xf32>
    %158 = arith.addf %157, %156 : vector<8x128xf32>
    %159 = arith.divf %157, %158 : vector<8x128xf32>
    %160 = arith.mulf %145, %122 : vector<8x128xf32>
    %161 = arith.mulf %136, %150 : vector<8x128xf32>
    %162 = arith.addf %160, %161 : vector<8x128xf32>
    %163 = math.tanh %162 : vector<8x128xf32>
    %164 = arith.mulf %159, %163 : vector<8x128xf32>
    %c4_i32 = arith.constant 4 : i32
    %165 = arith.index_cast %c4_i32 : i32 to index
    %c0_69 = arith.constant 0 : index
    %c0_70 = arith.constant 0 : index
    %166 = vector.load %arg2[%165, %c0_69, %c0_70] : memref<8x8x512xf32, #tpu.memory_space<vmem>>, vector<1x8x512xf32>
    %167 = vector.shape_cast %166 : vector<1x8x512xf32> to vector<8x512xf32>
    %168 = vector.extract_strided_slice %167 {offsets = [0, 0], sizes = [8, 128], strides = [1, 1]} : vector<8x512xf32> to vector<8x128xf32>
    %c0_71 = arith.constant 0 : index
    %c0_72 = arith.constant 0 : index
    %169 = vector.load %arg3[%c0_71, %c0_72] : memref<128x512xf32, #tpu.memory_space<vmem>>, vector<128x128xf32>
    %cst_73 = arith.constant dense<0.000000e+00> : vector<8x128xf32>
    %170 = tpu.matmul %164, %169, %cst_73 {dimension_numbers = #tpu.dot_dimension_numbers<[1], [0], [0], [1], [0, 0, 1, 1], [], []>} : vector<8x128xf32>, vector<128x128xf32>, vector<8x128xf32> -> vector<8x128xf32>
    %171 = arith.addf %168, %170 : vector<8x128xf32>
    %172 = arith.negf %171 : vector<8x128xf32>
    %173 = math.exp %172 : vector<8x128xf32>
    %cst_74 = arith.constant 1.000000e+00 : f32
    %174 = vector.broadcast %cst_74 : f32 to vector<8x128xf32>
    %175 = arith.addf %174, %173 : vector<8x128xf32>
    %176 = arith.divf %174, %175 : vector<8x128xf32>
    %177 = vector.extract_strided_slice %167 {offsets = [0, 128], sizes = [8, 128], strides = [1, 1]} : vector<8x512xf32> to vector<8x128xf32>
    %c0_75 = arith.constant 0 : index
    %c128_76 = arith.constant 128 : index
    %178 = vector.load %arg3[%c0_75, %c128_76] : memref<128x512xf32, #tpu.memory_space<vmem>>, vector<128x128xf32>
    %cst_77 = arith.constant dense<0.000000e+00> : vector<8x128xf32>
    %179 = tpu.matmul %164, %178, %cst_77 {dimension_numbers = #tpu.dot_dimension_numbers<[1], [0], [0], [1], [0, 0, 1, 1], [], []>} : vector<8x128xf32>, vector<128x128xf32>, vector<8x128xf32> -> vector<8x128xf32>
    %180 = arith.addf %177, %179 : vector<8x128xf32>
    %181 = arith.negf %180 : vector<8x128xf32>
    %182 = math.exp %181 : vector<8x128xf32>
    %cst_78 = arith.constant 1.000000e+00 : f32
    %183 = vector.broadcast %cst_78 : f32 to vector<8x128xf32>
    %184 = arith.addf %183, %182 : vector<8x128xf32>
    %185 = arith.divf %183, %184 : vector<8x128xf32>
    %186 = vector.extract_strided_slice %167 {offsets = [0, 256], sizes = [8, 128], strides = [1, 1]} : vector<8x512xf32> to vector<8x128xf32>
    %c0_79 = arith.constant 0 : index
    %c256_80 = arith.constant 256 : index
    %187 = vector.load %arg3[%c0_79, %c256_80] : memref<128x512xf32, #tpu.memory_space<vmem>>, vector<128x128xf32>
    %cst_81 = arith.constant dense<0.000000e+00> : vector<8x128xf32>
    %188 = tpu.matmul %164, %187, %cst_81 {dimension_numbers = #tpu.dot_dimension_numbers<[1], [0], [0], [1], [0, 0, 1, 1], [], []>} : vector<8x128xf32>, vector<128x128xf32>, vector<8x128xf32> -> vector<8x128xf32>
    %189 = arith.addf %186, %188 : vector<8x128xf32>
    %190 = math.tanh %189 : vector<8x128xf32>
    %191 = vector.extract_strided_slice %167 {offsets = [0, 384], sizes = [8, 128], strides = [1, 1]} : vector<8x512xf32> to vector<8x128xf32>
    %c0_82 = arith.constant 0 : index
    %c384_83 = arith.constant 384 : index
    %192 = vector.load %arg3[%c0_82, %c384_83] : memref<128x512xf32, #tpu.memory_space<vmem>>, vector<128x128xf32>
    %cst_84 = arith.constant dense<0.000000e+00> : vector<8x128xf32>
    %193 = tpu.matmul %164, %192, %cst_84 {dimension_numbers = #tpu.dot_dimension_numbers<[1], [0], [0], [1], [0, 0, 1, 1], [], []>} : vector<8x128xf32>, vector<128x128xf32>, vector<8x128xf32> -> vector<8x128xf32>
    %194 = arith.addf %191, %193 : vector<8x128xf32>
    %195 = arith.negf %194 : vector<8x128xf32>
    %196 = math.exp %195 : vector<8x128xf32>
    %cst_85 = arith.constant 1.000000e+00 : f32
    %197 = vector.broadcast %cst_85 : f32 to vector<8x128xf32>
    %198 = arith.addf %197, %196 : vector<8x128xf32>
    %199 = arith.divf %197, %198 : vector<8x128xf32>
    %200 = arith.mulf %185, %162 : vector<8x128xf32>
    %201 = arith.mulf %176, %190 : vector<8x128xf32>
    %202 = arith.addf %200, %201 : vector<8x128xf32>
    %203 = math.tanh %202 : vector<8x128xf32>
    %204 = arith.mulf %199, %203 : vector<8x128xf32>
    %c5_i32 = arith.constant 5 : i32
    %205 = arith.index_cast %c5_i32 : i32 to index
    %c0_86 = arith.constant 0 : index
    %c0_87 = arith.constant 0 : index
    %206 = vector.load %arg2[%205, %c0_86, %c0_87] : memref<8x8x512xf32, #tpu.memory_space<vmem>>, vector<1x8x512xf32>
    %207 = vector.shape_cast %206 : vector<1x8x512xf32> to vector<8x512xf32>
    %208 = vector.extract_strided_slice %207 {offsets = [0, 0], sizes = [8, 128], strides = [1, 1]} : vector<8x512xf32> to vector<8x128xf32>
    %c0_88 = arith.constant 0 : index
    %c0_89 = arith.constant 0 : index
    %209 = vector.load %arg3[%c0_88, %c0_89] : memref<128x512xf32, #tpu.memory_space<vmem>>, vector<128x128xf32>
    %cst_90 = arith.constant dense<0.000000e+00> : vector<8x128xf32>
    %210 = tpu.matmul %204, %209, %cst_90 {dimension_numbers = #tpu.dot_dimension_numbers<[1], [0], [0], [1], [0, 0, 1, 1], [], []>} : vector<8x128xf32>, vector<128x128xf32>, vector<8x128xf32> -> vector<8x128xf32>
    %211 = arith.addf %208, %210 : vector<8x128xf32>
    %212 = arith.negf %211 : vector<8x128xf32>
    %213 = math.exp %212 : vector<8x128xf32>
    %cst_91 = arith.constant 1.000000e+00 : f32
    %214 = vector.broadcast %cst_91 : f32 to vector<8x128xf32>
    %215 = arith.addf %214, %213 : vector<8x128xf32>
    %216 = arith.divf %214, %215 : vector<8x128xf32>
    %217 = vector.extract_strided_slice %207 {offsets = [0, 128], sizes = [8, 128], strides = [1, 1]} : vector<8x512xf32> to vector<8x128xf32>
    %c0_92 = arith.constant 0 : index
    %c128_93 = arith.constant 128 : index
    %218 = vector.load %arg3[%c0_92, %c128_93] : memref<128x512xf32, #tpu.memory_space<vmem>>, vector<128x128xf32>
    %cst_94 = arith.constant dense<0.000000e+00> : vector<8x128xf32>
    %219 = tpu.matmul %204, %218, %cst_94 {dimension_numbers = #tpu.dot_dimension_numbers<[1], [0], [0], [1], [0, 0, 1, 1], [], []>} : vector<8x128xf32>, vector<128x128xf32>, vector<8x128xf32> -> vector<8x128xf32>
    %220 = arith.addf %217, %219 : vector<8x128xf32>
    %221 = arith.negf %220 : vector<8x128xf32>
    %222 = math.exp %221 : vector<8x128xf32>
    %cst_95 = arith.constant 1.000000e+00 : f32
    %223 = vector.broadcast %cst_95 : f32 to vector<8x128xf32>
    %224 = arith.addf %223, %222 : vector<8x128xf32>
    %225 = arith.divf %223, %224 : vector<8x128xf32>
    %226 = vector.extract_strided_slice %207 {offsets = [0, 256], sizes = [8, 128], strides = [1, 1]} : vector<8x512xf32> to vector<8x128xf32>
    %c0_96 = arith.constant 0 : index
    %c256_97 = arith.constant 256 : index
    %227 = vector.load %arg3[%c0_96, %c256_97] : memref<128x512xf32, #tpu.memory_space<vmem>>, vector<128x128xf32>
    %cst_98 = arith.constant dense<0.000000e+00> : vector<8x128xf32>
    %228 = tpu.matmul %204, %227, %cst_98 {dimension_numbers = #tpu.dot_dimension_numbers<[1], [0], [0], [1], [0, 0, 1, 1], [], []>} : vector<8x128xf32>, vector<128x128xf32>, vector<8x128xf32> -> vector<8x128xf32>
    %229 = arith.addf %226, %228 : vector<8x128xf32>
    %230 = math.tanh %229 : vector<8x128xf32>
    %231 = vector.extract_strided_slice %207 {offsets = [0, 384], sizes = [8, 128], strides = [1, 1]} : vector<8x512xf32> to vector<8x128xf32>
    %c0_99 = arith.constant 0 : index
    %c384_100 = arith.constant 384 : index
    %232 = vector.load %arg3[%c0_99, %c384_100] : memref<128x512xf32, #tpu.memory_space<vmem>>, vector<128x128xf32>
    %cst_101 = arith.constant dense<0.000000e+00> : vector<8x128xf32>
    %233 = tpu.matmul %204, %232, %cst_101 {dimension_numbers = #tpu.dot_dimension_numbers<[1], [0], [0], [1], [0, 0, 1, 1], [], []>} : vector<8x128xf32>, vector<128x128xf32>, vector<8x128xf32> -> vector<8x128xf32>
    %234 = arith.addf %231, %233 : vector<8x128xf32>
    %235 = arith.negf %234 : vector<8x128xf32>
    %236 = math.exp %235 : vector<8x128xf32>
    %cst_102 = arith.constant 1.000000e+00 : f32
    %237 = vector.broadcast %cst_102 : f32 to vector<8x128xf32>
    %238 = arith.addf %237, %236 : vector<8x128xf32>
    %239 = arith.divf %237, %238 : vector<8x128xf32>
    %240 = arith.mulf %225, %202 : vector<8x128xf32>
    %241 = arith.mulf %216, %230 : vector<8x128xf32>
    %242 = arith.addf %240, %241 : vector<8x128xf32>
    %243 = math.tanh %242 : vector<8x128xf32>
    %244 = arith.mulf %239, %243 : vector<8x128xf32>
    %c6_i32 = arith.constant 6 : i32
    %245 = arith.index_cast %c6_i32 : i32 to index
    %c0_103 = arith.constant 0 : index
    %c0_104 = arith.constant 0 : index
    %246 = vector.load %arg2[%245, %c0_103, %c0_104] : memref<8x8x512xf32, #tpu.memory_space<vmem>>, vector<1x8x512xf32>
    %247 = vector.shape_cast %246 : vector<1x8x512xf32> to vector<8x512xf32>
    %248 = vector.extract_strided_slice %247 {offsets = [0, 0], sizes = [8, 128], strides = [1, 1]} : vector<8x512xf32> to vector<8x128xf32>
    %c0_105 = arith.constant 0 : index
    %c0_106 = arith.constant 0 : index
    %249 = vector.load %arg3[%c0_105, %c0_106] : memref<128x512xf32, #tpu.memory_space<vmem>>, vector<128x128xf32>
    %cst_107 = arith.constant dense<0.000000e+00> : vector<8x128xf32>
    %250 = tpu.matmul %244, %249, %cst_107 {dimension_numbers = #tpu.dot_dimension_numbers<[1], [0], [0], [1], [0, 0, 1, 1], [], []>} : vector<8x128xf32>, vector<128x128xf32>, vector<8x128xf32> -> vector<8x128xf32>
    %251 = arith.addf %248, %250 : vector<8x128xf32>
    %252 = arith.negf %251 : vector<8x128xf32>
    %253 = math.exp %252 : vector<8x128xf32>
    %cst_108 = arith.constant 1.000000e+00 : f32
    %254 = vector.broadcast %cst_108 : f32 to vector<8x128xf32>
    %255 = arith.addf %254, %253 : vector<8x128xf32>
    %256 = arith.divf %254, %255 : vector<8x128xf32>
    %257 = vector.extract_strided_slice %247 {offsets = [0, 128], sizes = [8, 128], strides = [1, 1]} : vector<8x512xf32> to vector<8x128xf32>
    %c0_109 = arith.constant 0 : index
    %c128_110 = arith.constant 128 : index
    %258 = vector.load %arg3[%c0_109, %c128_110] : memref<128x512xf32, #tpu.memory_space<vmem>>, vector<128x128xf32>
    %cst_111 = arith.constant dense<0.000000e+00> : vector<8x128xf32>
    %259 = tpu.matmul %244, %258, %cst_111 {dimension_numbers = #tpu.dot_dimension_numbers<[1], [0], [0], [1], [0, 0, 1, 1], [], []>} : vector<8x128xf32>, vector<128x128xf32>, vector<8x128xf32> -> vector<8x128xf32>
    %260 = arith.addf %257, %259 : vector<8x128xf32>
    %261 = arith.negf %260 : vector<8x128xf32>
    %262 = math.exp %261 : vector<8x128xf32>
    %cst_112 = arith.constant 1.000000e+00 : f32
    %263 = vector.broadcast %cst_112 : f32 to vector<8x128xf32>
    %264 = arith.addf %263, %262 : vector<8x128xf32>
    %265 = arith.divf %263, %264 : vector<8x128xf32>
    %266 = vector.extract_strided_slice %247 {offsets = [0, 256], sizes = [8, 128], strides = [1, 1]} : vector<8x512xf32> to vector<8x128xf32>
    %c0_113 = arith.constant 0 : index
    %c256_114 = arith.constant 256 : index
    %267 = vector.load %arg3[%c0_113, %c256_114] : memref<128x512xf32, #tpu.memory_space<vmem>>, vector<128x128xf32>
    %cst_115 = arith.constant dense<0.000000e+00> : vector<8x128xf32>
    %268 = tpu.matmul %244, %267, %cst_115 {dimension_numbers = #tpu.dot_dimension_numbers<[1], [0], [0], [1], [0, 0, 1, 1], [], []>} : vector<8x128xf32>, vector<128x128xf32>, vector<8x128xf32> -> vector<8x128xf32>
    %269 = arith.addf %266, %268 : vector<8x128xf32>
    %270 = math.tanh %269 : vector<8x128xf32>
    %271 = vector.extract_strided_slice %247 {offsets = [0, 384], sizes = [8, 128], strides = [1, 1]} : vector<8x512xf32> to vector<8x128xf32>
    %c0_116 = arith.constant 0 : index
    %c384_117 = arith.constant 384 : index
    %272 = vector.load %arg3[%c0_116, %c384_117] : memref<128x512xf32, #tpu.memory_space<vmem>>, vector<128x128xf32>
    %cst_118 = arith.constant dense<0.000000e+00> : vector<8x128xf32>
    %273 = tpu.matmul %244, %272, %cst_118 {dimension_numbers = #tpu.dot_dimension_numbers<[1], [0], [0], [1], [0, 0, 1, 1], [], []>} : vector<8x128xf32>, vector<128x128xf32>, vector<8x128xf32> -> vector<8x128xf32>
    %274 = arith.addf %271, %273 : vector<8x128xf32>
    %275 = arith.negf %274 : vector<8x128xf32>
    %276 = math.exp %275 : vector<8x128xf32>
    %cst_119 = arith.constant 1.000000e+00 : f32
    %277 = vector.broadcast %cst_119 : f32 to vector<8x128xf32>
    %278 = arith.addf %277, %276 : vector<8x128xf32>
    %279 = arith.divf %277, %278 : vector<8x128xf32>
    %280 = arith.mulf %265, %242 : vector<8x128xf32>
    %281 = arith.mulf %256, %270 : vector<8x128xf32>
    %282 = arith.addf %280, %281 : vector<8x128xf32>
    %283 = math.tanh %282 : vector<8x128xf32>
    %284 = arith.mulf %279, %283 : vector<8x128xf32>
    %c7_i32 = arith.constant 7 : i32
    %285 = arith.index_cast %c7_i32 : i32 to index
    %c0_120 = arith.constant 0 : index
    %c0_121 = arith.constant 0 : index
    %286 = vector.load %arg2[%285, %c0_120, %c0_121] : memref<8x8x512xf32, #tpu.memory_space<vmem>>, vector<1x8x512xf32>
    %287 = vector.shape_cast %286 : vector<1x8x512xf32> to vector<8x512xf32>
    %288 = vector.extract_strided_slice %287 {offsets = [0, 0], sizes = [8, 128], strides = [1, 1]} : vector<8x512xf32> to vector<8x128xf32>
    %c0_122 = arith.constant 0 : index
    %c0_123 = arith.constant 0 : index
    %289 = vector.load %arg3[%c0_122, %c0_123] : memref<128x512xf32, #tpu.memory_space<vmem>>, vector<128x128xf32>
    %cst_124 = arith.constant dense<0.000000e+00> : vector<8x128xf32>
    %290 = tpu.matmul %284, %289, %cst_124 {dimension_numbers = #tpu.dot_dimension_numbers<[1], [0], [0], [1], [0, 0, 1, 1], [], []>} : vector<8x128xf32>, vector<128x128xf32>, vector<8x128xf32> -> vector<8x128xf32>
    %291 = arith.addf %288, %290 : vector<8x128xf32>
    %292 = arith.negf %291 : vector<8x128xf32>
    %293 = math.exp %292 : vector<8x128xf32>
    %cst_125 = arith.constant 1.000000e+00 : f32
    %294 = vector.broadcast %cst_125 : f32 to vector<8x128xf32>
    %295 = arith.addf %294, %293 : vector<8x128xf32>
    %296 = arith.divf %294, %295 : vector<8x128xf32>
    %297 = vector.extract_strided_slice %287 {offsets = [0, 128], sizes = [8, 128], strides = [1, 1]} : vector<8x512xf32> to vector<8x128xf32>
    %c0_126 = arith.constant 0 : index
    %c128_127 = arith.constant 128 : index
    %298 = vector.load %arg3[%c0_126, %c128_127] : memref<128x512xf32, #tpu.memory_space<vmem>>, vector<128x128xf32>
    %cst_128 = arith.constant dense<0.000000e+00> : vector<8x128xf32>
    %299 = tpu.matmul %284, %298, %cst_128 {dimension_numbers = #tpu.dot_dimension_numbers<[1], [0], [0], [1], [0, 0, 1, 1], [], []>} : vector<8x128xf32>, vector<128x128xf32>, vector<8x128xf32> -> vector<8x128xf32>
    %300 = arith.addf %297, %299 : vector<8x128xf32>
    %301 = arith.negf %300 : vector<8x128xf32>
    %302 = math.exp %301 : vector<8x128xf32>
    %cst_129 = arith.constant 1.000000e+00 : f32
    %303 = vector.broadcast %cst_129 : f32 to vector<8x128xf32>
    %304 = arith.addf %303, %302 : vector<8x128xf32>
    %305 = arith.divf %303, %304 : vector<8x128xf32>
    %306 = vector.extract_strided_slice %287 {offsets = [0, 256], sizes = [8, 128], strides = [1, 1]} : vector<8x512xf32> to vector<8x128xf32>
    %c0_130 = arith.constant 0 : index
    %c256_131 = arith.constant 256 : index
    %307 = vector.load %arg3[%c0_130, %c256_131] : memref<128x512xf32, #tpu.memory_space<vmem>>, vector<128x128xf32>
    %cst_132 = arith.constant dense<0.000000e+00> : vector<8x128xf32>
    %308 = tpu.matmul %284, %307, %cst_132 {dimension_numbers = #tpu.dot_dimension_numbers<[1], [0], [0], [1], [0, 0, 1, 1], [], []>} : vector<8x128xf32>, vector<128x128xf32>, vector<8x128xf32> -> vector<8x128xf32>
    %309 = arith.addf %306, %308 : vector<8x128xf32>
    %310 = math.tanh %309 : vector<8x128xf32>
    %311 = vector.extract_strided_slice %287 {offsets = [0, 384], sizes = [8, 128], strides = [1, 1]} : vector<8x512xf32> to vector<8x128xf32>
    %c0_133 = arith.constant 0 : index
    %c384_134 = arith.constant 384 : index
    %312 = vector.load %arg3[%c0_133, %c384_134] : memref<128x512xf32, #tpu.memory_space<vmem>>, vector<128x128xf32>
    %cst_135 = arith.constant dense<0.000000e+00> : vector<8x128xf32>
    %313 = tpu.matmul %284, %312, %cst_135 {dimension_numbers = #tpu.dot_dimension_numbers<[1], [0], [0], [1], [0, 0, 1, 1], [], []>} : vector<8x128xf32>, vector<128x128xf32>, vector<8x128xf32> -> vector<8x128xf32>
    %314 = arith.addf %311, %313 : vector<8x128xf32>
    %315 = arith.negf %314 : vector<8x128xf32>
    %316 = math.exp %315 : vector<8x128xf32>
    %cst_136 = arith.constant 1.000000e+00 : f32
    %317 = vector.broadcast %cst_136 : f32 to vector<8x128xf32>
    %318 = arith.addf %317, %316 : vector<8x128xf32>
    %319 = arith.divf %317, %318 : vector<8x128xf32>
    %320 = arith.mulf %305, %282 : vector<8x128xf32>
    %321 = arith.mulf %296, %310 : vector<8x128xf32>
    %322 = arith.addf %320, %321 : vector<8x128xf32>
    %323 = math.tanh %322 : vector<8x128xf32>
    %324 = arith.mulf %319, %323 : vector<8x128xf32>
    %c8_i32 = arith.constant 8 : i32
    %c0_137 = arith.constant 0 : index
    %c0_138 = arith.constant 0 : index
    %325 = vector.load %arg4[%c0_137, %c0_138] : memref<8x128xf32, #tpu.memory_space<vmem>>, vector<8x128xf32>
    tpu.vector_store %arg4[%c0_137, %c0_138], %324 {strides = array<i32>} : memref<8x128xf32, #tpu.memory_space<vmem>>, vector<8x128xf32>,
    %c0_139 = arith.constant 0 : index
    %c0_140 = arith.constant 0 : index
    %326 = vector.load %arg5[%c0_139, %c0_140] : memref<8x128xf32, #tpu.memory_space<vmem>>, vector<8x128xf32>
    tpu.vector_store %arg5[%c0_139, %c0_140], %322 {strides = array<i32>} : memref<8x128xf32, #tpu.memory_space<vmem>>, vector<8x128xf32>,
    return
  }
  func.func @transform_0(%arg0: i32, %arg1: i32) -> (i32, i32, i32) {
    %c0_i32 = arith.constant 0 : i32
    %c0_i32_0 = arith.constant 0 : i32
    return %arg1, %arg0, %c0_i32 : i32, i32, i32
  }
  func.func @transform_1(%arg0: i32, %arg1: i32) -> (i32, i32) {
    %c0_i32 = arith.constant 0 : i32
    %c0_i32_0 = arith.constant 0 : i32
    %c0_i32_1 = arith.constant 0 : i32
    return %c0_i32, %c0_i32_0 : i32, i32
  }
  func.func @transform_2(%arg0: i32, %arg1: i32) -> (i32, i32) {
    %c0_i32 = arith.constant 0 : i32
    %c0_i32_0 = arith.constant 0 : i32
    return %arg0, %c0_i32 : i32, i32
  }
  func.func @transform_3(%arg0: i32, %arg1: i32) -> (i32, i32) {
    %c0_i32 = arith.constant 0 : i32
    %c0_i32_0 = arith.constant 0 : i32
    return %arg0, %c0_i32 : i32, i32
  }
}

</mosaic_0001>

<llo_original>
// kernel: lstm_forward.1
$region0: #{lstm_forward.1}
  #allocation0 [shape = 'u32[]', space=smem, size = 0x4, offset = 0x4, fixed_abs, tag = 'smem constant byte address 0x4 - core index']
  #allocation1 [shape = 'u32[72,128]{1,0:T(1,128)}', space=vmem, size = 0x9000, scoped, tag = 'internal scratch']
  %s0 = inlined_call_operand.vmem [shape: f32[8,8,512], index: 0, kind: input, shape index: {}]
  %s1 = inlined_call_operand.vmem [shape: f32[128,512], index: 1, kind: input, shape index: {}]
  %s2 = inlined_call_operand.vmem [shape: f32[8,128], index: 2, kind: output, shape index: {0}]
  %s3 = inlined_call_operand.vmem [shape: f32[8,128], index: 3, kind: output, shape index: {1}]
  %4 = xla_tuple %s2, %s3
  %s5 = sld [smem:[#allocation0]]
  $region30: #{lstm_forward.1} parent=0
    _
  %s7 = ssub.s32 1, %s5
  %s8 = scalar_select 0, %s7, %s5
  // Predicated region
  $region2: #{lstm_forward.1} parent=0 // pred_check
    _
  $region3: #{lstm_forward.1} parent=0 // pred_check_branch
    %10 = sbr.rel (0) target = $region5
  $region4: #{lstm_forward.1} parent=0 // pred_region
    _
  $region5: #{lstm_forward.1} parent=0 // pred_fallthru
    _
  // Predicated region
  $region6: #{lstm_forward.1} parent=0 // pred_check
    _
  $region7: #{lstm_forward.1} parent=0 // pred_check_branch
    %12 = sbr.rel (0) target = $region9
  $region8: #{lstm_forward.1} parent=0 // pred_region
    _
  $region9: #{lstm_forward.1} parent=0 // pred_fallthru
    _
  %p13 = scmp.eq.s32.totalorder 0, 0
  // Predicated region
  $region10: #{lstm_forward.1} parent=0 // pred_check
    %p14 = pneg %p13
  $region11: #{lstm_forward.1} parent=0 // pred_check_branch
    %16 = sbr.rel (%p14) target = $region13
  $region12: #{lstm_forward.1} parent=0 // pred_region
    %17 = vst [vmem:[%s2] sm:$0xff] 0.0
    %18 = vst [vmem:[%s3] sm:$0xff] 0.0
  $region13: #{lstm_forward.1} parent=0 // pred_fallthru
    _
  %v19 = vld [vmem:[%s2] sm:$0xff]
  %v20 = vld [vmem:[%s3] sm:$0xff]
  %v21 = vld [vmem:[%s0] sm:$0xff]
  %v22 = vld [vmem:[%s0 + $0x8] sm:$0xff]
  %v23 = vld [vmem:[%s0 + $0x10] sm:$0xff]
  %v24 = vld [vmem:[%s0 + $0x18] sm:$0xff]
  %v25 = vld [vmem:[%s1] sm:$0xff]
  %v26 = vld [vmem:[%s1 + $0x20] sm:$0xff]
  %v27 = vld [vmem:[%s1 + $0x40] sm:$0xff]
  %v28 = vld [vmem:[%s1 + $0x60] sm:$0xff]
  %v29 = vld [vmem:[%s1 + $0x80] sm:$0xff]
  %v30 = vld [vmem:[%s1 + $0xa0] sm:$0xff]
  %v31 = vld [vmem:[%s1 + $0xc0] sm:$0xff]
  %v32 = vld [vmem:[%s1 + $0xe0] sm:$0xff]
  %v33 = vld [vmem:[%s1 + $0x100] sm:$0xff]
  %v34 = vld [vmem:[%s1 + $0x120] sm:$0xff]
  %v35 = vld [vmem:[%s1 + $0x140] sm:$0xff]
  %v36 = vld [vmem:[%s1 + $0x160] sm:$0xff]
  %v37 = vld [vmem:[%s1 + $0x180] sm:$0xff]
  %v38 = vld [vmem:[%s1 + $0x1a0] sm:$0xff]
  %v39 = vld [vmem:[%s1 + $0x1c0] sm:$0xff]
  %v40 = vld [vmem:[%s1 + $0x1e0] sm:$0xff]
  %41 = vmatpush.msra.mxu0 %v40
  %42 = vmatpush.msra.mxu0 %v39
  %43 = vmatpush.msra.mxu0 %v38
  %44 = vmatpush.msra.mxu0 %v37
  %45 = vmatpush.msra.mxu0 %v36
  %46 = vmatpush.msra.mxu0 %v35
  %47 = vmatpush.msra.mxu0 %v34
  %48 = vmatpush.msra.mxu0 %v33
  %49 = vmatpush.msra.mxu0 %v32
  %50 = vmatpush.msra.mxu0 %v31
  %51 = vmatpush.msra.mxu0 %v30
  %52 = vmatpush.msra.mxu0 %v29
  %53 = vmatpush.msra.mxu0 %v28
  %54 = vmatpush.msra.mxu0 %v27
  %55 = vmatpush.msra.mxu0 %v26
  %56 = vmatpush.msra.mxu0 %v25
  %57 = vmatmul.f32.gmra.mxu0 %v19
  %v58 = vpop.f32.mrf.mxu0
  %v59 = vadd.f32 0.0, %v58
  %60 = vdwg.mxu0
  %v61 = vadd.f32 %v21, %v59
  %v62 = vxor.u32 %v61, 2147483648
  %v63 = vmul.f32 %v62, 1.442695
  %v64 = vpow.pop %v63
  %v65 = vadd.f32 %v64, 1.0
  %v66 = vrcp.pop %v65
  %v67 = vmul.f32 %v65, %v66
  %v68 = vsub.f32 1.0, %v67
  %v69 = vmul.f32 %v66, %v68
  %v70 = vadd.f32 %v66, %v69
  %vm71 = vweird.f32 %v65
  %vm72 = vweird.f32 %v66
  %vm73 = vmor %vm71, %vm72
  %v74 = vsel %vm73, %v66, %v70
  %v75 = vand.u32 2147483647, %v65
  %vm76 = vcmp.eq.f32.partialorder %v75, 8.507059e+37
  %v77 = vand.u32 %v65, 2147483648
  %v78 = vor.u32 1.1754944e-38, %v77
  %v79 = vsel %vm76, %v78, %v74
  %v80 = vmul.f32 1.0, %v79
  %v81 = vld [vmem:[%s1 + $0x8] sm:$0xff]
  %v82 = vld [vmem:[%s1 + $0x28] sm:$0xff]
  %v83 = vld [vmem:[%s1 + $0x48] sm:$0xff]
  %v84 = vld [vmem:[%s1 + $0x68] sm:$0xff]
  %v85 = vld [vmem:[%s1 + $0x88] sm:$0xff]
  %v86 = vld [vmem:[%s1 + $0xa8] sm:$0xff]
  %v87 = vld [vmem:[%s1 + $0xc8] sm:$0xff]
  %v88 = vld [vmem:[%s1 + $0xe8] sm:$0xff]
  %v89 = vld [vmem:[%s1 + $0x108] sm:$0xff]
  %v90 = vld [vmem:[%s1 + $0x128] sm:$0xff]
  %v91 = vld [vmem:[%s1 + $0x148] sm:$0xff]
  %v92 = vld [vmem:[%s1 + $0x168] sm:$0xff]
  %v93 = vld [vmem:[%s1 + $0x188] sm:$0xff]
  %v94 = vld [vmem:[%s1 + $0x1a8] sm:$0xff]
  %v95 = vld [vmem:[%s1 + $0x1c8] sm:$0xff]
  %v96 = vld [vmem:[%s1 + $0x1e8] sm:$0xff]
  %97 = vmatpush.msra.mxu0 %v96
  %98 = vmatpush.msra.mxu0 %v95
  %99 = vmatpush.msra.mxu0 %v94
  %100 = vmatpush.msra.mxu0 %v93
  %101 = vmatpush.msra.mxu0 %v92
  %102 = vmatpush.msra.mxu0 %v91
  %103 = vmatpush.msra.mxu0 %v90
  %104 = vmatpush.msra.mxu0 %v89
  %105 = vmatpush.msra.mxu0 %v88
  %106 = vmatpush.msra.mxu0 %v87
  %107 = vmatpush.msra.mxu0 %v86
  %108 = vmatpush.msra.mxu0 %v85
  %109 = vmatpush.msra.mxu0 %v84
  %110 = vmatpush.msra.mxu0 %v83
  %111 = vmatpush.msra.mxu0 %v82
  %112 = vmatpush.msra.mxu0 %v81
  %113 = vmatmul.f32.gmra.mxu0 %v19
  %v114 = vpop.f32.mrf.mxu0
  %v115 = vadd.f32 0.0, %v114
  %116 = vdwg.mxu0
  %v117 = vadd.f32 %v22, %v115
  %v118 = vxor.u32 %v117, 2147483648
  %v119 = vmul.f32 %v118, 1.442695
  %v120 = vpow.pop %v119
  %v121 = vadd.f32 %v120, 1.0
  %v122 = vrcp.pop %v121
  %v123 = vmul.f32 %v121, %v122
  %v124 = vsub.f32 1.0, %v123
  %v125 = vmul.f32 %v122, %v124
  %v126 = vadd.f32 %v122, %v125
  %vm127 = vweird.f32 %v121
  %vm128 = vweird.f32 %v122
  %vm129 = vmor %vm127, %vm128
  %v130 = vsel %vm129, %v122, %v126
  %v131 = vand.u32 2147483647, %v121
  %vm132 = vcmp.eq.f32.partialorder %v131, 8.507059e+37
  %v133 = vand.u32 %v121, 2147483648
  %v134 = vor.u32 1.1754944e-38, %v133
  %v135 = vsel %vm132, %v134, %v130
  %v136 = vmul.f32 1.0, %v135
  %v137 = vld [vmem:[%s1 + $0x10] sm:$0xff]
  %v138 = vld [vmem:[%s1 + $0x30] sm:$0xff]
  %v139 = vld [vmem:[%s1 + $0x50] sm:$0xff]
  %v140 = vld [vmem:[%s1 + $0x70] sm:$0xff]
  %v141 = vld [vmem:[%s1 + $0x90] sm:$0xff]
  %v142 = vld [vmem:[%s1 + $0xb0] sm:$0xff]
  %v143 = vld [vmem:[%s1 + $0xd0] sm:$0xff]
  %v144 = vld [vmem:[%s1 + $0xf0] sm:$0xff]
  %v145 = vld [vmem:[%s1 + $0x110] sm:$0xff]
  %v146 = vld [vmem:[%s1 + $0x130] sm:$0xff]
  %v147 = vld [vmem:[%s1 + $0x150] sm:$0xff]
  %v148 = vld [vmem:[%s1 + $0x170] sm:$0xff]
  %v149 = vld [vmem:[%s1 + $0x190] sm:$0xff]
  %v150 = vld [vmem:[%s1 + $0x1b0] sm:$0xff]
  %v151 = vld [vmem:[%s1 + $0x1d0] sm:$0xff]
  %v152 = vld [vmem:[%s1 + $0x1f0] sm:$0xff]
  %153 = vmatpush.msra.mxu0 %v152
  %154 = vmatpush.msra.mxu0 %v151
  %155 = vmatpush.msra.mxu0 %v150
  %156 = vmatpush.msra.mxu0 %v149
  %157 = vmatpush.msra.mxu0 %v148
  %158 = vmatpush.msra.mxu0 %v147
  %159 = vmatpush.msra.mxu0 %v146
  %160 = vmatpush.msra.mxu0 %v145
  %161 = vmatpush.msra.mxu0 %v144
  %162 = vmatpush.msra.mxu0 %v143
  %163 = vmatpush.msra.mxu0 %v142
  %164 = vmatpush.msra.mxu0 %v141
  %165 = vmatpush.msra.mxu0 %v140
  %166 = vmatpush.msra.mxu0 %v139
  %167 = vmatpush.msra.mxu0 %v138
  %168 = vmatpush.msra.mxu0 %v137
  %169 = vmatmul.f32.gmra.mxu0 %v19
  %v170 = vpop.f32.mrf.mxu0
  %v171 = vadd.f32 0.0, %v170
  %172 = vdwg.mxu0
  %v173 = vadd.f32 %v23, %v171
  %v174 = vtanh.pop %v173
  %v175 = vld [vmem:[%s1 + $0x18] sm:$0xff]
  %v176 = vld [vmem:[%s1 + $0x38] sm:$0xff]
  %v177 = vld [vmem:[%s1 + $0x58] sm:$0xff]
  %v178 = vld [vmem:[%s1 + $0x78] sm:$0xff]
  %v179 = vld [vmem:[%s1 + $0x98] sm:$0xff]
  %v180 = vld [vmem:[%s1 + $0xb8] sm:$0xff]
  %v181 = vld [vmem:[%s1 + $0xd8] sm:$0xff]
  %v182 = vld [vmem:[%s1 + $0xf8] sm:$0xff]
  %v183 = vld [vmem:[%s1 + $0x118] sm:$0xff]
  %v184 = vld [vmem:[%s1 + $0x138] sm:$0xff]
  %v185 = vld [vmem:[%s1 + $0x158] sm:$0xff]
  %v186 = vld [vmem:[%s1 + $0x178] sm:$0xff]
  %v187 = vld [vmem:[%s1 + $0x198] sm:$0xff]
  %v188 = vld [vmem:[%s1 + $0x1b8] sm:$0xff]
  %v189 = vld [vmem:[%s1 + $0x1d8] sm:$0xff]
  %v190 = vld [vmem:[%s1 + $0x1f8] sm:$0xff]
  %191 = vmatpush.msra.mxu0 %v190
  %192 = vmatpush.msra.mxu0 %v189
  %193 = vmatpush.msra.mxu0 %v188
  %194 = vmatpush.msra.mxu0 %v187
  %195 = vmatpush.msra.mxu0 %v186
  %196 = vmatpush.msra.mxu0 %v185
  %197 = vmatpush.msra.mxu0 %v184
  %198 = vmatpush.msra.mxu0 %v183
  %199 = vmatpush.msra.mxu0 %v182
  %200 = vmatpush.msra.mxu0 %v181
  %201 = vmatpush.msra.mxu0 %v180
  %202 = vmatpush.msra.mxu0 %v179
  %203 = vmatpush.msra.mxu0 %v178
  %204 = vmatpush.msra.mxu0 %v177
  %205 = vmatpush.msra.mxu0 %v176
  %206 = vmatpush.msra.mxu0 %v175
  %207 = vmatmul.f32.gmra.mxu0 %v19
  %v208 = vpop.f32.mrf.mxu0
  %v209 = vadd.f32 0.0, %v208
  %210 = vdwg.mxu0
  %v211 = vadd.f32 %v24, %v209
  %v212 = vxor.u32 %v211, 2147483648
  %v213 = vmul.f32 %v212, 1.442695
  %v214 = vpow.pop %v213
  %v215 = vadd.f32 %v214, 1.0
  %v216 = vrcp.pop %v215
  %v217 = vmul.f32 %v215, %v216
  %v218 = vsub.f32 1.0, %v217
  %v219 = vmul.f32 %v216, %v218
  %v220 = vadd.f32 %v216, %v219
  %vm221 = vweird.f32 %v215
  %vm222 = vweird.f32 %v216
  %vm223 = vmor %vm221, %vm222
  %v224 = vsel %vm223, %v216, %v220
  %v225 = vand.u32 2147483647, %v215
  %vm226 = vcmp.eq.f32.partialorder %v225, 8.507059e+37
  %v227 = vand.u32 %v215, 2147483648
  %v228 = vor.u32 1.1754944e-38, %v227
  %v229 = vsel %vm226, %v228, %v224
  %v230 = vmul.f32 1.0, %v229
  %v231 = vmul.f32 %v136, %v20
  %v232 = vmul.f32 %v80, %v174
  %v233 = vadd.f32 %v231, %v232
  %v234 = vtanh.pop %v233
  %v235 = vmul.f32 %v230, %v234
  %s236 = scalar_lea.vmem %s0, 32
  %v237 = vld [vmem:[%s236] sm:$0xff]
  %v238 = vld [vmem:[%s236 + $0x8] sm:$0xff]
  %v239 = vld [vmem:[%s236 + $0x10] sm:$0xff]
  %v240 = vld [vmem:[%s236 + $0x18] sm:$0xff]
  %241 = vmatpush.msra.mxu0 %v40
  %242 = vmatpush.msra.mxu0 %v39
  %243 = vmatpush.msra.mxu0 %v38
  %244 = vmatpush.msra.mxu0 %v37
  %245 = vmatpush.msra.mxu0 %v36
  %246 = vmatpush.msra.mxu0 %v35
  %247 = vmatpush.msra.mxu0 %v34
  %248 = vmatpush.msra.mxu0 %v33
  %249 = vmatpush.msra.mxu0 %v32
  %250 = vmatpush.msra.mxu0 %v31
  %251 = vmatpush.msra.mxu0 %v30
  %252 = vmatpush.msra.mxu0 %v29
  %253 = vmatpush.msra.mxu0 %v28
  %254 = vmatpush.msra.mxu0 %v27
  %255 = vmatpush.msra.mxu0 %v26
  %256 = vmatpush.msra.mxu0 %v25
  %257 = vmatmul.f32.gmra.mxu0 %v235
  %v258 = vpop.f32.mrf.mxu0
  %v259 = vadd.f32 0.0, %v258
  %260 = vdwg.mxu0
  %v261 = vadd.f32 %v237, %v259
  %v262 = vxor.u32 %v261, 2147483648
  %v263 = vmul.f32 %v262, 1.442695
  %v264 = vpow.pop %v263
  %v265 = vadd.f32 %v264, 1.0
  %v266 = vrcp.pop %v265
  %v267 = vmul.f32 %v265, %v266
  %v268 = vsub.f32 1.0, %v267
  %v269 = vmul.f32 %v266, %v268
  %v270 = vadd.f32 %v266, %v269
  %vm271 = vweird.f32 %v265
  %vm272 = vweird.f32 %v266
  %vm273 = vmor %vm271, %vm272
  %v274 = vsel %vm273, %v266, %v270
  %v275 = vand.u32 2147483647, %v265
  %vm276 = vcmp.eq.f32.partialorder %v275, 8.507059e+37
  %v277 = vand.u32 %v265, 2147483648
  %v278 = vor.u32 1.1754944e-38, %v277
  %v279 = vsel %vm276, %v278, %v274
  %v280 = vmul.f32 1.0, %v279
  %281 = vmatpush.msra.mxu0 %v96
  %282 = vmatpush.msra.mxu0 %v95
  %283 = vmatpush.msra.mxu0 %v94
  %284 = vmatpush.msra.mxu0 %v93
  %285 = vmatpush.msra.mxu0 %v92
  %286 = vmatpush.msra.mxu0 %v91
  %287 = vmatpush.msra.mxu0 %v90
  %288 = vmatpush.msra.mxu0 %v89
  %289 = vmatpush.msra.mxu0 %v88
  %290 = vmatpush.msra.mxu0 %v87
  %291 = vmatpush.msra.mxu0 %v86
  %292 = vmatpush.msra.mxu0 %v85
  %293 = vmatpush.msra.mxu0 %v84
  %294 = vmatpush.msra.mxu0 %v83
  %295 = vmatpush.msra.mxu0 %v82
  %296 = vmatpush.msra.mxu0 %v81
  %297 = vmatmul.f32.gmra.mxu0 %v235
  %v298 = vpop.f32.mrf.mxu0
  %v299 = vadd.f32 0.0, %v298
  %300 = vdwg.mxu0
  %v301 = vadd.f32 %v238, %v299
  %v302 = vxor.u32 %v301, 2147483648
  %v303 = vmul.f32 %v302, 1.442695
  %v304 = vpow.pop %v303
  %v305 = vadd.f32 %v304, 1.0
  %v306 = vrcp.pop %v305
  %v307 = vmul.f32 %v305, %v306
  %v308 = vsub.f32 1.0, %v307
  %v309 = vmul.f32 %v306, %v308
  %v310 = vadd.f32 %v306, %v309
  %vm311 = vweird.f32 %v305
  %vm312 = vweird.f32 %v306
  %vm313 = vmor %vm311, %vm312
  %v314 = vsel %vm313, %v306, %v310
  %v315 = vand.u32 2147483647, %v305
  %vm316 = vcmp.eq.f32.partialorder %v315, 8.507059e+37
  %v317 = vand.u32 %v305, 2147483648
  %v318 = vor.u32 1.1754944e-38, %v317
  %v319 = vsel %vm316, %v318, %v314
  %v320 = vmul.f32 1.0, %v319
  %321 = vmatpush.msra.mxu0 %v152
  %322 = vmatpush.msra.mxu0 %v151
  %323 = vmatpush.msra.mxu0 %v150
  %324 = vmatpush.msra.mxu0 %v149
  %325 = vmatpush.msra.mxu0 %v148
  %326 = vmatpush.msra.mxu0 %v147
  %327 = vmatpush.msra.mxu0 %v146
  %328 = vmatpush.msra.mxu0 %v145
  %329 = vmatpush.msra.mxu0 %v144
  %330 = vmatpush.msra.mxu0 %v143
  %331 = vmatpush.msra.mxu0 %v142
  %332 = vmatpush.msra.mxu0 %v141
  %333 = vmatpush.msra.mxu0 %v140
  %334 = vmatpush.msra.mxu0 %v139
  %335 = vmatpush.msra.mxu0 %v138
  %336 = vmatpush.msra.mxu0 %v137
  %337 = vmatmul.f32.gmra.mxu0 %v235
  %v338 = vpop.f32.mrf.mxu0
  %v339 = vadd.f32 0.0, %v338
  %340 = vdwg.mxu0
  %v341 = vadd.f32 %v239, %v339
  %v342 = vtanh.pop %v341
  %343 = vmatpush.msra.mxu0 %v190
  %344 = vmatpush.msra.mxu0 %v189
  %345 = vmatpush.msra.mxu0 %v188
  %346 = vmatpush.msra.mxu0 %v187
  %347 = vmatpush.msra.mxu0 %v186
  %348 = vmatpush.msra.mxu0 %v185
  %349 = vmatpush.msra.mxu0 %v184
  %350 = vmatpush.msra.mxu0 %v183
  %351 = vmatpush.msra.mxu0 %v182
  %352 = vmatpush.msra.mxu0 %v181
  %353 = vmatpush.msra.mxu0 %v180
  %354 = vmatpush.msra.mxu0 %v179
  %355 = vmatpush.msra.mxu0 %v178
  %356 = vmatpush.msra.mxu0 %v177
  %357 = vmatpush.msra.mxu0 %v176
  %358 = vmatpush.msra.mxu0 %v175
  %359 = vmatmul.f32.gmra.mxu0 %v235
  %v360 = vpop.f32.mrf.mxu0
  %v361 = vadd.f32 0.0, %v360
  %362 = vdwg.mxu0
  %v363 = vadd.f32 %v240, %v361
  %v364 = vxor.u32 %v363, 2147483648
  %v365 = vmul.f32 %v364, 1.442695
  %v366 = vpow.pop %v365
  %v367 = vadd.f32 %v366, 1.0
  %v368 = vrcp.pop %v367
  %v369 = vmul.f32 %v367, %v368
  %v370 = vsub.f32 1.0, %v369
  %v371 = vmul.f32 %v368, %v370
  %v372 = vadd.f32 %v368, %v371
  %vm373 = vweird.f32 %v367
  %vm374 = vweird.f32 %v368
  %vm375 = vmor %vm373, %vm374
  %v376 = vsel %vm375, %v368, %v372
  %v377 = vand.u32 2147483647, %v367
  %vm378 = vcmp.eq.f32.partialorder %v377, 8.507059e+37
  %v379 = vand.u32 %v367, 2147483648
  %v380 = vor.u32 1.1754944e-38, %v379
  %v381 = vsel %vm378, %v380, %v376
  %v382 = vmul.f32 1.0, %v381
  %v383 = vmul.f32 %v320, %v233
  %v384 = vmul.f32 %v280, %v342
  %v385 = vadd.f32 %v383, %v384
  %v386 = vtanh.pop %v385
  %v387 = vmul.f32 %v382, %v386
  %s388 = scalar_lea.vmem %s0, 64
  %v389 = vld [vmem:[%s388] sm:$0xff]
  %v390 = vld [vmem:[%s388 + $0x8] sm:$0xff]
  %v391 = vld [vmem:[%s388 + $0x10] sm:$0xff]
  %v392 = vld [vmem:[%s388 + $0x18] sm:$0xff]
  %393 = vmatpush.msra.mxu0 %v40
  %394 = vmatpush.msra.mxu0 %v39
  %395 = vmatpush.msra.mxu0 %v38
  %396 = vmatpush.msra.mxu0 %v37
  %397 = vmatpush.msra.mxu0 %v36
  %398 = vmatpush.msra.mxu0 %v35
  %399 = vmatpush.msra.mxu0 %v34
  %400 = vmatpush.msra.mxu0 %v33
  %401 = vmatpush.msra.mxu0 %v32
  %402 = vmatpush.msra.mxu0 %v31
  %403 = vmatpush.msra.mxu0 %v30
  %404 = vmatpush.msra.mxu0 %v29
  %405 = vmatpush.msra.mxu0 %v28
  %406 = vmatpush.msra.mxu0 %v27
  %407 = vmatpush.msra.mxu0 %v26
  %408 = vmatpush.msra.mxu0 %v25
  %409 = vmatmul.f32.gmra.mxu0 %v387
  %v410 = vpop.f32.mrf.mxu0
  %v411 = vadd.f32 0.0, %v410
  %412 = vdwg.mxu0
  %v413 = vadd.f32 %v389, %v411
  %v414 = vxor.u32 %v413, 2147483648
  %v415 = vmul.f32 %v414, 1.442695
  %v416 = vpow.pop %v415
  %v417 = vadd.f32 %v416, 1.0
  %v418 = vrcp.pop %v417
  %v419 = vmul.f32 %v417, %v418
  %v420 = vsub.f32 1.0, %v419
  %v421 = vmul.f32 %v418, %v420
  %v422 = vadd.f32 %v418, %v421
  %vm423 = vweird.f32 %v417
  %vm424 = vweird.f32 %v418
  %vm425 = vmor %vm423, %vm424
  %v426 = vsel %vm425, %v418, %v422
  %v427 = vand.u32 2147483647, %v417
  %vm428 = vcmp.eq.f32.partialorder %v427, 8.507059e+37
  %v429 = vand.u32 %v417, 2147483648
  %v430 = vor.u32 1.1754944e-38, %v429
  %v431 = vsel %vm428, %v430, %v426
  %v432 = vmul.f32 1.0, %v431
  %433 = vmatpush.msra.mxu0 %v96
  %434 = vmatpush.msra.mxu0 %v95
  %435 = vmatpush.msra.mxu0 %v94
  %436 = vmatpush.msra.mxu0 %v93
  %437 = vmatpush.msra.mxu0 %v92
  %438 = vmatpush.msra.mxu0 %v91
  %439 = vmatpush.msra.mxu0 %v90
  %440 = vmatpush.msra.mxu0 %v89
  %441 = vmatpush.msra.mxu0 %v88
  %442 = vmatpush.msra.mxu0 %v87
  %443 = vmatpush.msra.mxu0 %v86
  %444 = vmatpush.msra.mxu0 %v85
  %445 = vmatpush.msra.mxu0 %v84
  %446 = vmatpush.msra.mxu0 %v83
  %447 = vmatpush.msra.mxu0 %v82
  %448 = vmatpush.msra.mxu0 %v81
  %449 = vmatmul.f32.gmra.mxu0 %v387
  %v450 = vpop.f32.mrf.mxu0
  %v451 = vadd.f32 0.0, %v450
  %452 = vdwg.mxu0
  %v453 = vadd.f32 %v390, %v451
  %v454 = vxor.u32 %v453, 2147483648
  %v455 = vmul.f32 %v454, 1.442695
  %v456 = vpow.pop %v455
  %v457 = vadd.f32 %v456, 1.0
  %v458 = vrcp.pop %v457
  %v459 = vmul.f32 %v457, %v458
  %v460 = vsub.f32 1.0, %v459
  %v461 = vmul.f32 %v458, %v460
  %v462 = vadd.f32 %v458, %v461
  %vm463 = vweird.f32 %v457
  %vm464 = vweird.f32 %v458
  %vm465 = vmor %vm463, %vm464
  %v466 = vsel %vm465, %v458, %v462
  %v467 = vand.u32 2147483647, %v457
  %vm468 = vcmp.eq.f32.partialorder %v467, 8.507059e+37
  %v469 = vand.u32 %v457, 2147483648
  %v470 = vor.u32 1.1754944e-38, %v469
  %v471 = vsel %vm468, %v470, %v466
  %v472 = vmul.f32 1.0, %v471
  %473 = vmatpush.msra.mxu0 %v152
  %474 = vmatpush.msra.mxu0 %v151
  %475 = vmatpush.msra.mxu0 %v150
  %476 = vmatpush.msra.mxu0 %v149
  %477 = vmatpush.msra.mxu0 %v148
  %478 = vmatpush.msra.mxu0 %v147
  %479 = vmatpush.msra.mxu0 %v146
  %480 = vmatpush.msra.mxu0 %v145
  %481 = vmatpush.msra.mxu0 %v144
  %482 = vmatpush.msra.mxu0 %v143
  %483 = vmatpush.msra.mxu0 %v142
  %484 = vmatpush.msra.mxu0 %v141
  %485 = vmatpush.msra.mxu0 %v140
  %486 = vmatpush.msra.mxu0 %v139
  %487 = vmatpush.msra.mxu0 %v138
  %488 = vmatpush.msra.mxu0 %v137
  %489 = vmatmul.f32.gmra.mxu0 %v387
  %v490 = vpop.f32.mrf.mxu0
  %v491 = vadd.f32 0.0, %v490
  %492 = vdwg.mxu0
  %v493 = vadd.f32 %v391, %v491
  %v494 = vtanh.pop %v493
  %495 = vmatpush.msra.mxu0 %v190
  %496 = vmatpush.msra.mxu0 %v189
  %497 = vmatpush.msra.mxu0 %v188
  %498 = vmatpush.msra.mxu0 %v187
  %499 = vmatpush.msra.mxu0 %v186
  %500 = vmatpush.msra.mxu0 %v185
  %501 = vmatpush.msra.mxu0 %v184
  %502 = vmatpush.msra.mxu0 %v183
  %503 = vmatpush.msra.mxu0 %v182
  %504 = vmatpush.msra.mxu0 %v181
  %505 = vmatpush.msra.mxu0 %v180
  %506 = vmatpush.msra.mxu0 %v179
  %507 = vmatpush.msra.mxu0 %v178
  %508 = vmatpush.msra.mxu0 %v177
  %509 = vmatpush.msra.mxu0 %v176
  %510 = vmatpush.msra.mxu0 %v175
  %511 = vmatmul.f32.gmra.mxu0 %v387
  %v512 = vpop.f32.mrf.mxu0
  %v513 = vadd.f32 0.0, %v512
  %514 = vdwg.mxu0
  %v515 = vadd.f32 %v392, %v513
  %v516 = vxor.u32 %v515, 2147483648
  %v517 = vmul.f32 %v516, 1.442695
  %v518 = vpow.pop %v517
  %v519 = vadd.f32 %v518, 1.0
  %v520 = vrcp.pop %v519
  %v521 = vmul.f32 %v519, %v520
  %v522 = vsub.f32 1.0, %v521
  %v523 = vmul.f32 %v520, %v522
  %v524 = vadd.f32 %v520, %v523
  %vm525 = vweird.f32 %v519
  %vm526 = vweird.f32 %v520
  %vm527 = vmor %vm525, %vm526
  %v528 = vsel %vm527, %v520, %v524
  %v529 = vand.u32 2147483647, %v519
  %vm530 = vcmp.eq.f32.partialorder %v529, 8.507059e+37
  %v531 = vand.u32 %v519, 2147483648
  %v532 = vor.u32 1.1754944e-38, %v531
  %v533 = vsel %vm530, %v532, %v528
  %v534 = vmul.f32 1.0, %v533
  %v535 = vmul.f32 %v472, %v385
  %v536 = vmul.f32 %v432, %v494
  %v537 = vadd.f32 %v535, %v536
  %v538 = vtanh.pop %v537
  %v539 = vmul.f32 %v534, %v538
  %s540 = scalar_lea.vmem %s0, 96
  %v541 = vld [vmem:[%s540] sm:$0xff]
  %v542 = vld [vmem:[%s540 + $0x8] sm:$0xff]
  %v543 = vld [vmem:[%s540 + $0x10] sm:$0xff]
  %v544 = vld [vmem:[%s540 + $0x18] sm:$0xff]
  %545 = vmatpush.msra.mxu0 %v40
  %546 = vmatpush.msra.mxu0 %v39
  %547 = vmatpush.msra.mxu0 %v38
  %548 = vmatpush.msra.mxu0 %v37
  %549 = vmatpush.msra.mxu0 %v36
  %550 = vmatpush.msra.mxu0 %v35
  %551 = vmatpush.msra.mxu0 %v34
  %552 = vmatpush.msra.mxu0 %v33
  %553 = vmatpush.msra.mxu0 %v32
  %554 = vmatpush.msra.mxu0 %v31
  %555 = vmatpush.msra.mxu0 %v30
  %556 = vmatpush.msra.mxu0 %v29
  %557 = vmatpush.msra.mxu0 %v28
  %558 = vmatpush.msra.mxu0 %v27
  %559 = vmatpush.msra.mxu0 %v26
  %560 = vmatpush.msra.mxu0 %v25
  %561 = vmatmul.f32.gmra.mxu0 %v539
  %v562 = vpop.f32.mrf.mxu0
  %v563 = vadd.f32 0.0, %v562
  %564 = vdwg.mxu0
  %v565 = vadd.f32 %v541, %v563
  %v566 = vxor.u32 %v565, 2147483648
  %v567 = vmul.f32 %v566, 1.442695
  %v568 = vpow.pop %v567
  %v569 = vadd.f32 %v568, 1.0
  %v570 = vrcp.pop %v569
  %v571 = vmul.f32 %v569, %v570
  %v572 = vsub.f32 1.0, %v571
  %v573 = vmul.f32 %v570, %v572
  %v574 = vadd.f32 %v570, %v573
  %vm575 = vweird.f32 %v569
  %vm576 = vweird.f32 %v570
  %vm577 = vmor %vm575, %vm576
  %v578 = vsel %vm577, %v570, %v574
  %v579 = vand.u32 2147483647, %v569
  %vm580 = vcmp.eq.f32.partialorder %v579, 8.507059e+37
  %v581 = vand.u32 %v569, 2147483648
  %v582 = vor.u32 1.1754944e-38, %v581
  %v583 = vsel %vm580, %v582, %v578
  %v584 = vmul.f32 1.0, %v583
  %585 = vmatpush.msra.mxu0 %v96
  %586 = vmatpush.msra.mxu0 %v95
  %587 = vmatpush.msra.mxu0 %v94
  %588 = vmatpush.msra.mxu0 %v93
  %589 = vmatpush.msra.mxu0 %v92
  %590 = vmatpush.msra.mxu0 %v91
  %591 = vmatpush.msra.mxu0 %v90
  %592 = vmatpush.msra.mxu0 %v89
  %593 = vmatpush.msra.mxu0 %v88
  %594 = vmatpush.msra.mxu0 %v87
  %595 = vmatpush.msra.mxu0 %v86
  %596 = vmatpush.msra.mxu0 %v85
  %597 = vmatpush.msra.mxu0 %v84
  %598 = vmatpush.msra.mxu0 %v83
  %599 = vmatpush.msra.mxu0 %v82
  %600 = vmatpush.msra.mxu0 %v81
  %601 = vmatmul.f32.gmra.mxu0 %v539
  %v602 = vpop.f32.mrf.mxu0
  %v603 = vadd.f32 0.0, %v602
  %604 = vdwg.mxu0
  %v605 = vadd.f32 %v542, %v603
  %v606 = vxor.u32 %v605, 2147483648
  %v607 = vmul.f32 %v606, 1.442695
  %v608 = vpow.pop %v607
  %v609 = vadd.f32 %v608, 1.0
  %v610 = vrcp.pop %v609
  %v611 = vmul.f32 %v609, %v610
  %v612 = vsub.f32 1.0, %v611
  %v613 = vmul.f32 %v610, %v612
  %v614 = vadd.f32 %v610, %v613
  %vm615 = vweird.f32 %v609
  %vm616 = vweird.f32 %v610
  %vm617 = vmor %vm615, %vm616
  %v618 = vsel %vm617, %v610, %v614
  %v619 = vand.u32 2147483647, %v609
  %vm620 = vcmp.eq.f32.partialorder %v619, 8.507059e+37
  %v621 = vand.u32 %v609, 2147483648
  %v622 = vor.u32 1.1754944e-38, %v621
  %v623 = vsel %vm620, %v622, %v618
  %v624 = vmul.f32 1.0, %v623
  %625 = vmatpush.msra.mxu0 %v152
  %626 = vmatpush.msra.mxu0 %v151
  %627 = vmatpush.msra.mxu0 %v150
  %628 = vmatpush.msra.mxu0 %v149
  %629 = vmatpush.msra.mxu0 %v148
  %630 = vmatpush.msra.mxu0 %v147
  %631 = vmatpush.msra.mxu0 %v146
  %632 = vmatpush.msra.mxu0 %v145
  %633 = vmatpush.msra.mxu0 %v144
  %634 = vmatpush.msra.mxu0 %v143
  %635 = vmatpush.msra.mxu0 %v142
  %636 = vmatpush.msra.mxu0 %v141
  %637 = vmatpush.msra.mxu0 %v140
  %638 = vmatpush.msra.mxu0 %v139
  %639 = vmatpush.msra.mxu0 %v138
  %640 = vmatpush.msra.mxu0 %v137
  %641 = vmatmul.f32.gmra.mxu0 %v539
  %v642 = vpop.f32.mrf.mxu0
  %v643 = vadd.f32 0.0, %v642
  %644 = vdwg.mxu0
  %v645 = vadd.f32 %v543, %v643
  %v646 = vtanh.pop %v645
  %647 = vmatpush.msra.mxu0 %v190
  %648 = vmatpush.msra.mxu0 %v189
  %649 = vmatpush.msra.mxu0 %v188
  %650 = vmatpush.msra.mxu0 %v187
  %651 = vmatpush.msra.mxu0 %v186
  %652 = vmatpush.msra.mxu0 %v185
  %653 = vmatpush.msra.mxu0 %v184
  %654 = vmatpush.msra.mxu0 %v183
  %655 = vmatpush.msra.mxu0 %v182
  %656 = vmatpush.msra.mxu0 %v181
  %657 = vmatpush.msra.mxu0 %v180
  %658 = vmatpush.msra.mxu0 %v179
  %659 = vmatpush.msra.mxu0 %v178
  %660 = vmatpush.msra.mxu0 %v177
  %661 = vmatpush.msra.mxu0 %v176
  %662 = vmatpush.msra.mxu0 %v175
  %663 = vmatmul.f32.gmra.mxu0 %v539
  %v664 = vpop.f32.mrf.mxu0
  %v665 = vadd.f32 0.0, %v664
  %666 = vdwg.mxu0
  %v667 = vadd.f32 %v544, %v665
  %v668 = vxor.u32 %v667, 2147483648
  %v669 = vmul.f32 %v668, 1.442695
  %v670 = vpow.pop %v669
  %v671 = vadd.f32 %v670, 1.0
  %v672 = vrcp.pop %v671
  %v673 = vmul.f32 %v671, %v672
  %v674 = vsub.f32 1.0, %v673
  %v675 = vmul.f32 %v672, %v674
  %v676 = vadd.f32 %v672, %v675
  %vm677 = vweird.f32 %v671
  %vm678 = vweird.f32 %v672
  %vm679 = vmor %vm677, %vm678
  %v680 = vsel %vm679, %v672, %v676
  %v681 = vand.u32 2147483647, %v671
  %vm682 = vcmp.eq.f32.partialorder %v681, 8.507059e+37
  %v683 = vand.u32 %v671, 2147483648
  %v684 = vor.u32 1.1754944e-38, %v683
  %v685 = vsel %vm682, %v684, %v680
  %v686 = vmul.f32 1.0, %v685
  %v687 = vmul.f32 %v624, %v537
  %v688 = vmul.f32 %v584, %v646
  %v689 = vadd.f32 %v687, %v688
  %v690 = vtanh.pop %v689
  %v691 = vmul.f32 %v686, %v690
  %s692 = scalar_lea.vmem %s0, 128
  %v693 = vld [vmem:[%s692] sm:$0xff]
  %v694 = vld [vmem:[%s692 + $0x8] sm:$0xff]
  %v695 = vld [vmem:[%s692 + $0x10] sm:$0xff]
  %v696 = vld [vmem:[%s692 + $0x18] sm:$0xff]
  %697 = vmatpush.msra.mxu0 %v40
  %698 = vmatpush.msra.mxu0 %v39
  %699 = vmatpush.msra.mxu0 %v38
  %700 = vmatpush.msra.mxu0 %v37
  %701 = vmatpush.msra.mxu0 %v36
  %702 = vmatpush.msra.mxu0 %v35
  %703 = vmatpush.msra.mxu0 %v34
  %704 = vmatpush.msra.mxu0 %v33
  %705 = vmatpush.msra.mxu0 %v32
  %706 = vmatpush.msra.mxu0 %v31
  %707 = vmatpush.msra.mxu0 %v30
  %708 = vmatpush.msra.mxu0 %v29
  %709 = vmatpush.msra.mxu0 %v28
  %710 = vmatpush.msra.mxu0 %v27
  %711 = vmatpush.msra.mxu0 %v26
  %712 = vmatpush.msra.mxu0 %v25
  %713 = vmatmul.f32.gmra.mxu0 %v691
  %v714 = vpop.f32.mrf.mxu0
  %v715 = vadd.f32 0.0, %v714
  %716 = vdwg.mxu0
  %v717 = vadd.f32 %v693, %v715
  %v718 = vxor.u32 %v717, 2147483648
  %v719 = vmul.f32 %v718, 1.442695
  %v720 = vpow.pop %v719
  %v721 = vadd.f32 %v720, 1.0
  %v722 = vrcp.pop %v721
  %v723 = vmul.f32 %v721, %v722
  %v724 = vsub.f32 1.0, %v723
  %v725 = vmul.f32 %v722, %v724
  %v726 = vadd.f32 %v722, %v725
  %vm727 = vweird.f32 %v721
  %vm728 = vweird.f32 %v722
  %vm729 = vmor %vm727, %vm728
  %v730 = vsel %vm729, %v722, %v726
  %v731 = vand.u32 2147483647, %v721
  %vm732 = vcmp.eq.f32.partialorder %v731, 8.507059e+37
  %v733 = vand.u32 %v721, 2147483648
  %v734 = vor.u32 1.1754944e-38, %v733
  %v735 = vsel %vm732, %v734, %v730
  %v736 = vmul.f32 1.0, %v735
  %737 = vmatpush.msra.mxu0 %v96
  %738 = vmatpush.msra.mxu0 %v95
  %739 = vmatpush.msra.mxu0 %v94
  %740 = vmatpush.msra.mxu0 %v93
  %741 = vmatpush.msra.mxu0 %v92
  %742 = vmatpush.msra.mxu0 %v91
  %743 = vmatpush.msra.mxu0 %v90
  %744 = vmatpush.msra.mxu0 %v89
  %745 = vmatpush.msra.mxu0 %v88
  %746 = vmatpush.msra.mxu0 %v87
  %747 = vmatpush.msra.mxu0 %v86
  %748 = vmatpush.msra.mxu0 %v85
  %749 = vmatpush.msra.mxu0 %v84
  %750 = vmatpush.msra.mxu0 %v83
  %751 = vmatpush.msra.mxu0 %v82
  %752 = vmatpush.msra.mxu0 %v81
  %753 = vmatmul.f32.gmra.mxu0 %v691
  %v754 = vpop.f32.mrf.mxu0
  %v755 = vadd.f32 0.0, %v754
  %756 = vdwg.mxu0
  %v757 = vadd.f32 %v694, %v755
  %v758 = vxor.u32 %v757, 2147483648
  %v759 = vmul.f32 %v758, 1.442695
  %v760 = vpow.pop %v759
  %v761 = vadd.f32 %v760, 1.0
  %v762 = vrcp.pop %v761
  %v763 = vmul.f32 %v761, %v762
  %v764 = vsub.f32 1.0, %v763
  %v765 = vmul.f32 %v762, %v764
  %v766 = vadd.f32 %v762, %v765
  %vm767 = vweird.f32 %v761
  %vm768 = vweird.f32 %v762
  %vm769 = vmor %vm767, %vm768
  %v770 = vsel %vm769, %v762, %v766
  %v771 = vand.u32 2147483647, %v761
  %vm772 = vcmp.eq.f32.partialorder %v771, 8.507059e+37
  %v773 = vand.u32 %v761, 2147483648
  %v774 = vor.u32 1.1754944e-38, %v773
  %v775 = vsel %vm772, %v774, %v770
  %v776 = vmul.f32 1.0, %v775
  %777 = vmatpush.msra.mxu0 %v152
  %778 = vmatpush.msra.mxu0 %v151
  %779 = vmatpush.msra.mxu0 %v150
  %780 = vmatpush.msra.mxu0 %v149
  %781 = vmatpush.msra.mxu0 %v148
  %782 = vmatpush.msra.mxu0 %v147
  %783 = vmatpush.msra.mxu0 %v146
  %784 = vmatpush.msra.mxu0 %v145
  %785 = vmatpush.msra.mxu0 %v144
  %786 = vmatpush.msra.mxu0 %v143
  %787 = vmatpush.msra.mxu0 %v142
  %788 = vmatpush.msra.mxu0 %v141
  %789 = vmatpush.msra.mxu0 %v140
  %790 = vmatpush.msra.mxu0 %v139
  %791 = vmatpush.msra.mxu0 %v138
  %792 = vmatpush.msra.mxu0 %v137
  %793 = vmatmul.f32.gmra.mxu0 %v691
  %v794 = vpop.f32.mrf.mxu0
  %v795 = vadd.f32 0.0, %v794
  %796 = vdwg.mxu0
  %v797 = vadd.f32 %v695, %v795
  %v798 = vtanh.pop %v797
  %799 = vmatpush.msra.mxu0 %v190
  %800 = vmatpush.msra.mxu0 %v189
  %801 = vmatpush.msra.mxu0 %v188
  %802 = vmatpush.msra.mxu0 %v187
  %803 = vmatpush.msra.mxu0 %v186
  %804 = vmatpush.msra.mxu0 %v185
  %805 = vmatpush.msra.mxu0 %v184
  %806 = vmatpush.msra.mxu0 %v183
  %807 = vmatpush.msra.mxu0 %v182
  %808 = vmatpush.msra.mxu0 %v181
  %809 = vmatpush.msra.mxu0 %v180
  %810 = vmatpush.msra.mxu0 %v179
  %811 = vmatpush.msra.mxu0 %v178
  %812 = vmatpush.msra.mxu0 %v177
  %813 = vmatpush.msra.mxu0 %v176
  %814 = vmatpush.msra.mxu0 %v175
  %815 = vmatmul.f32.gmra.mxu0 %v691
  %v816 = vpop.f32.mrf.mxu0
  %v817 = vadd.f32 0.0, %v816
  %818 = vdwg.mxu0
  %v819 = vadd.f32 %v696, %v817
  %v820 = vxor.u32 %v819, 2147483648
  %v821 = vmul.f32 %v820, 1.442695
  %v822 = vpow.pop %v821
  %v823 = vadd.f32 %v822, 1.0
  %v824 = vrcp.pop %v823
  %v825 = vmul.f32 %v823, %v824
  %v826 = vsub.f32 1.0, %v825
  %v827 = vmul.f32 %v824, %v826
  %v828 = vadd.f32 %v824, %v827
  %vm829 = vweird.f32 %v823
  %vm830 = vweird.f32 %v824
  %vm831 = vmor %vm829, %vm830
  %v832 = vsel %vm831, %v824, %v828
  %v833 = vand.u32 2147483647, %v823
  %vm834 = vcmp.eq.f32.partialorder %v833, 8.507059e+37
  %v835 = vand.u32 %v823, 2147483648
  %v836 = vor.u32 1.1754944e-38, %v835
  %v837 = vsel %vm834, %v836, %v832
  %v838 = vmul.f32 1.0, %v837
  %v839 = vmul.f32 %v776, %v689
  %v840 = vmul.f32 %v736, %v798
  %v841 = vadd.f32 %v839, %v840
  %v842 = vtanh.pop %v841
  %v843 = vmul.f32 %v838, %v842
  %s844 = scalar_lea.vmem %s0, 160
  %v845 = vld [vmem:[%s844] sm:$0xff]
  %v846 = vld [vmem:[%s844 + $0x8] sm:$0xff]
  %v847 = vld [vmem:[%s844 + $0x10] sm:$0xff]
  %v848 = vld [vmem:[%s844 + $0x18] sm:$0xff]
  %849 = vmatpush.msra.mxu0 %v40
  %850 = vmatpush.msra.mxu0 %v39
  %851 = vmatpush.msra.mxu0 %v38
  %852 = vmatpush.msra.mxu0 %v37
  %853 = vmatpush.msra.mxu0 %v36
  %854 = vmatpush.msra.mxu0 %v35
  %855 = vmatpush.msra.mxu0 %v34
  %856 = vmatpush.msra.mxu0 %v33
  %857 = vmatpush.msra.mxu0 %v32
  %858 = vmatpush.msra.mxu0 %v31
  %859 = vmatpush.msra.mxu0 %v30
  %860 = vmatpush.msra.mxu0 %v29
  %861 = vmatpush.msra.mxu0 %v28
  %862 = vmatpush.msra.mxu0 %v27
  %863 = vmatpush.msra.mxu0 %v26
  %864 = vmatpush.msra.mxu0 %v25
  %865 = vmatmul.f32.gmra.mxu0 %v843
  %v866 = vpop.f32.mrf.mxu0
  %v867 = vadd.f32 0.0, %v866
  %868 = vdwg.mxu0
  %v869 = vadd.f32 %v845, %v867
  %v870 = vxor.u32 %v869, 2147483648
  %v871 = vmul.f32 %v870, 1.442695
  %v872 = vpow.pop %v871
  %v873 = vadd.f32 %v872, 1.0
  %v874 = vrcp.pop %v873
  %v875 = vmul.f32 %v873, %v874
  %v876 = vsub.f32 1.0, %v875
  %v877 = vmul.f32 %v874, %v876
  %v878 = vadd.f32 %v874, %v877
  %vm879 = vweird.f32 %v873
  %vm880 = vweird.f32 %v874
  %vm881 = vmor %vm879, %vm880
  %v882 = vsel %vm881, %v874, %v878
  %v883 = vand.u32 2147483647, %v873
  %vm884 = vcmp.eq.f32.partialorder %v883, 8.507059e+37
  %v885 = vand.u32 %v873, 2147483648
  %v886 = vor.u32 1.1754944e-38, %v885
  %v887 = vsel %vm884, %v886, %v882
  %v888 = vmul.f32 1.0, %v887
  %889 = vmatpush.msra.mxu0 %v96
  %890 = vmatpush.msra.mxu0 %v95
  %891 = vmatpush.msra.mxu0 %v94
  %892 = vmatpush.msra.mxu0 %v93
  %893 = vmatpush.msra.mxu0 %v92
  %894 = vmatpush.msra.mxu0 %v91
  %895 = vmatpush.msra.mxu0 %v90
  %896 = vmatpush.msra.mxu0 %v89
  %897 = vmatpush.msra.mxu0 %v88
  %898 = vmatpush.msra.mxu0 %v87
  %899 = vmatpush.msra.mxu0 %v86
  %900 = vmatpush.msra.mxu0 %v85
  %901 = vmatpush.msra.mxu0 %v84
  %902 = vmatpush.msra.mxu0 %v83
  %903 = vmatpush.msra.mxu0 %v82
  %904 = vmatpush.msra.mxu0 %v81
  %905 = vmatmul.f32.gmra.mxu0 %v843
  %v906 = vpop.f32.mrf.mxu0
  %v907 = vadd.f32 0.0, %v906
  %908 = vdwg.mxu0
  %v909 = vadd.f32 %v846, %v907
  %v910 = vxor.u32 %v909, 2147483648
  %v911 = vmul.f32 %v910, 1.442695
  %v912 = vpow.pop %v911
  %v913 = vadd.f32 %v912, 1.0
  %v914 = vrcp.pop %v913
  %v915 = vmul.f32 %v913, %v914
  %v916 = vsub.f32 1.0, %v915
  %v917 = vmul.f32 %v914, %v916
  %v918 = vadd.f32 %v914, %v917
  %vm919 = vweird.f32 %v913
  %vm920 = vweird.f32 %v914
  %vm921 = vmor %vm919, %vm920
  %v922 = vsel %vm921, %v914, %v918
  %v923 = vand.u32 2147483647, %v913
  %vm924 = vcmp.eq.f32.partialorder %v923, 8.507059e+37
  %v925 = vand.u32 %v913, 2147483648
  %v926 = vor.u32 1.1754944e-38, %v925
  %v927 = vsel %vm924, %v926, %v922
  %v928 = vmul.f32 1.0, %v927
  %929 = vmatpush.msra.mxu0 %v152
  %930 = vmatpush.msra.mxu0 %v151
  %931 = vmatpush.msra.mxu0 %v150
  %932 = vmatpush.msra.mxu0 %v149
  %933 = vmatpush.msra.mxu0 %v148
  %934 = vmatpush.msra.mxu0 %v147
  %935 = vmatpush.msra.mxu0 %v146
  %936 = vmatpush.msra.mxu0 %v145
  %937 = vmatpush.msra.mxu0 %v144
  %938 = vmatpush.msra.mxu0 %v143
  %939 = vmatpush.msra.mxu0 %v142
  %940 = vmatpush.msra.mxu0 %v141
  %941 = vmatpush.msra.mxu0 %v140
  %942 = vmatpush.msra.mxu0 %v139
  %943 = vmatpush.msra.mxu0 %v138
  %944 = vmatpush.msra.mxu0 %v137
  %945 = vmatmul.f32.gmra.mxu0 %v843
  %v946 = vpop.f32.mrf.mxu0
  %v947 = vadd.f32 0.0, %v946
  %948 = vdwg.mxu0
  %v949 = vadd.f32 %v847, %v947
  %v950 = vtanh.pop %v949
  %951 = vmatpush.msra.mxu0 %v190
  %952 = vmatpush.msra.mxu0 %v189
  %953 = vmatpush.msra.mxu0 %v188
  %954 = vmatpush.msra.mxu0 %v187
  %955 = vmatpush.msra.mxu0 %v186
  %956 = vmatpush.msra.mxu0 %v185
  %957 = vmatpush.msra.mxu0 %v184
  %958 = vmatpush.msra.mxu0 %v183
  %959 = vmatpush.msra.mxu0 %v182
  %960 = vmatpush.msra.mxu0 %v181
  %961 = vmatpush.msra.mxu0 %v180
  %962 = vmatpush.msra.mxu0 %v179
  %963 = vmatpush.msra.mxu0 %v178
  %964 = vmatpush.msra.mxu0 %v177
  %965 = vmatpush.msra.mxu0 %v176
  %966 = vmatpush.msra.mxu0 %v175
  %967 = vmatmul.f32.gmra.mxu0 %v843
  %v968 = vpop.f32.mrf.mxu0
  %v969 = vadd.f32 0.0, %v968
  %970 = vdwg.mxu0
  %v971 = vadd.f32 %v848, %v969
  %v972 = vxor.u32 %v971, 2147483648
  %v973 = vmul.f32 %v972, 1.442695
  %v974 = vpow.pop %v973
  %v975 = vadd.f32 %v974, 1.0
  %v976 = vrcp.pop %v975
  %v977 = vmul.f32 %v975, %v976
  %v978 = vsub.f32 1.0, %v977
  %v979 = vmul.f32 %v976, %v978
  %v980 = vadd.f32 %v976, %v979
  %vm981 = vweird.f32 %v975
  %vm982 = vweird.f32 %v976
  %vm983 = vmor %vm981, %vm982
  %v984 = vsel %vm983, %v976, %v980
  %v985 = vand.u32 2147483647, %v975
  %vm986 = vcmp.eq.f32.partialorder %v985, 8.507059e+37
  %v987 = vand.u32 %v975, 2147483648
  %v988 = vor.u32 1.1754944e-38, %v987
  %v989 = vsel %vm986, %v988, %v984
  %v990 = vmul.f32 1.0, %v989
  %v991 = vmul.f32 %v928, %v841
  %v992 = vmul.f32 %v888, %v950
  %v993 = vadd.f32 %v991, %v992
  %v994 = vtanh.pop %v993
  %v995 = vmul.f32 %v990, %v994
  %s996 = scalar_lea.vmem %s0, 192
  %v997 = vld [vmem:[%s996] sm:$0xff]
  %v998 = vld [vmem:[%s996 + $0x8] sm:$0xff]
  %v999 = vld [vmem:[%s996 + $0x10] sm:$0xff]
  %v1000 = vld [vmem:[%s996 + $0x18] sm:$0xff]
  %1001 = vmatpush.msra.mxu0 %v40
  %1002 = vmatpush.msra.mxu0 %v39
  %1003 = vmatpush.msra.mxu0 %v38
  %1004 = vmatpush.msra.mxu0 %v37
  %1005 = vmatpush.msra.mxu0 %v36
  %1006 = vmatpush.msra.mxu0 %v35
  %1007 = vmatpush.msra.mxu0 %v34
  %1008 = vmatpush.msra.mxu0 %v33
  %1009 = vmatpush.msra.mxu0 %v32
  %1010 = vmatpush.msra.mxu0 %v31
  %1011 = vmatpush.msra.mxu0 %v30
  %1012 = vmatpush.msra.mxu0 %v29
  %1013 = vmatpush.msra.mxu0 %v28
  %1014 = vmatpush.msra.mxu0 %v27
  %1015 = vmatpush.msra.mxu0 %v26
  %1016 = vmatpush.msra.mxu0 %v25
  %1017 = vmatmul.f32.gmra.mxu0 %v995
  %v1018 = vpop.f32.mrf.mxu0
  %v1019 = vadd.f32 0.0, %v1018
  %1020 = vdwg.mxu0
  %v1021 = vadd.f32 %v997, %v1019
  %v1022 = vxor.u32 %v1021, 2147483648
  %v1023 = vmul.f32 %v1022, 1.442695
  %v1024 = vpow.pop %v1023
  %v1025 = vadd.f32 %v1024, 1.0
  %v1026 = vrcp.pop %v1025
  %v1027 = vmul.f32 %v1025, %v1026
  %v1028 = vsub.f32 1.0, %v1027
  %v1029 = vmul.f32 %v1026, %v1028
  %v1030 = vadd.f32 %v1026, %v1029
  %vm1031 = vweird.f32 %v1025
  %vm1032 = vweird.f32 %v1026
  %vm1033 = vmor %vm1031, %vm1032
  %v1034 = vsel %vm1033, %v1026, %v1030
  %v1035 = vand.u32 2147483647, %v1025
  %vm1036 = vcmp.eq.f32.partialorder %v1035, 8.507059e+37
  %v1037 = vand.u32 %v1025, 2147483648
  %v1038 = vor.u32 1.1754944e-38, %v1037
  %v1039 = vsel %vm1036, %v1038, %v1034
  %v1040 = vmul.f32 1.0, %v1039
  %1041 = vmatpush.msra.mxu0 %v96
  %1042 = vmatpush.msra.mxu0 %v95
  %1043 = vmatpush.msra.mxu0 %v94
  %1044 = vmatpush.msra.mxu0 %v93
  %1045 = vmatpush.msra.mxu0 %v92
  %1046 = vmatpush.msra.mxu0 %v91
  %1047 = vmatpush.msra.mxu0 %v90
  %1048 = vmatpush.msra.mxu0 %v89
  %1049 = vmatpush.msra.mxu0 %v88
  %1050 = vmatpush.msra.mxu0 %v87
  %1051 = vmatpush.msra.mxu0 %v86
  %1052 = vmatpush.msra.mxu0 %v85
  %1053 = vmatpush.msra.mxu0 %v84
  %1054 = vmatpush.msra.mxu0 %v83
  %1055 = vmatpush.msra.mxu0 %v82
  %1056 = vmatpush.msra.mxu0 %v81
  %1057 = vmatmul.f32.gmra.mxu0 %v995
  %v1058 = vpop.f32.mrf.mxu0
  %v1059 = vadd.f32 0.0, %v1058
  %1060 = vdwg.mxu0
  %v1061 = vadd.f32 %v998, %v1059
  %v1062 = vxor.u32 %v1061, 2147483648
  %v1063 = vmul.f32 %v1062, 1.442695
  %v1064 = vpow.pop %v1063
  %v1065 = vadd.f32 %v1064, 1.0
  %v1066 = vrcp.pop %v1065
  %v1067 = vmul.f32 %v1065, %v1066
  %v1068 = vsub.f32 1.0, %v1067
  %v1069 = vmul.f32 %v1066, %v1068
  %v1070 = vadd.f32 %v1066, %v1069
  %vm1071 = vweird.f32 %v1065
  %vm1072 = vweird.f32 %v1066
  %vm1073 = vmor %vm1071, %vm1072
  %v1074 = vsel %vm1073, %v1066, %v1070
  %v1075 = vand.u32 2147483647, %v1065
  %vm1076 = vcmp.eq.f32.partialorder %v1075, 8.507059e+37
  %v1077 = vand.u32 %v1065, 2147483648
  %v1078 = vor.u32 1.1754944e-38, %v1077
  %v1079 = vsel %vm1076, %v1078, %v1074
  %v1080 = vmul.f32 1.0, %v1079
  %1081 = vmatpush.msra.mxu0 %v152
  %1082 = vmatpush.msra.mxu0 %v151
  %1083 = vmatpush.msra.mxu0 %v150
  %1084 = vmatpush.msra.mxu0 %v149
  %1085 = vmatpush.msra.mxu0 %v148
  %1086 = vmatpush.msra.mxu0 %v147
  %1087 = vmatpush.msra.mxu0 %v146
  %1088 = vmatpush.msra.mxu0 %v145
  %1089 = vmatpush.msra.mxu0 %v144
  %1090 = vmatpush.msra.mxu0 %v143
  %1091 = vmatpush.msra.mxu0 %v142
  %1092 = vmatpush.msra.mxu0 %v141
  %1093 = vmatpush.msra.mxu0 %v140
  %1094 = vmatpush.msra.mxu0 %v139
  %1095 = vmatpush.msra.mxu0 %v138
  %1096 = vmatpush.msra.mxu0 %v137
  %1097 = vmatmul.f32.gmra.mxu0 %v995
  %v1098 = vpop.f32.mrf.mxu0
  %v1099 = vadd.f32 0.0, %v1098
  %1100 = vdwg.mxu0
  %v1101 = vadd.f32 %v999, %v1099
  %v1102 = vtanh.pop %v1101
  %1103 = vmatpush.msra.mxu0 %v190
  %1104 = vmatpush.msra.mxu0 %v189
  %1105 = vmatpush.msra.mxu0 %v188
  %1106 = vmatpush.msra.mxu0 %v187
  %1107 = vmatpush.msra.mxu0 %v186
  %1108 = vmatpush.msra.mxu0 %v185
  %1109 = vmatpush.msra.mxu0 %v184
  %1110 = vmatpush.msra.mxu0 %v183
  %1111 = vmatpush.msra.mxu0 %v182
  %1112 = vmatpush.msra.mxu0 %v181
  %1113 = vmatpush.msra.mxu0 %v180
  %1114 = vmatpush.msra.mxu0 %v179
  %1115 = vmatpush.msra.mxu0 %v178
  %1116 = vmatpush.msra.mxu0 %v177
  %1117 = vmatpush.msra.mxu0 %v176
  %1118 = vmatpush.msra.mxu0 %v175
  %1119 = vmatmul.f32.gmra.mxu0 %v995
  %v1120 = vpop.f32.mrf.mxu0
  %v1121 = vadd.f32 0.0, %v1120
  %1122 = vdwg.mxu0
  %v1123 = vadd.f32 %v1000, %v1121
  %v1124 = vxor.u32 %v1123, 2147483648
  %v1125 = vmul.f32 %v1124, 1.442695
  %v1126 = vpow.pop %v1125
  %v1127 = vadd.f32 %v1126, 1.0
  %v1128 = vrcp.pop %v1127
  %v1129 = vmul.f32 %v1127, %v1128
  %v1130 = vsub.f32 1.0, %v1129
  %v1131 = vmul.f32 %v1128, %v1130
  %v1132 = vadd.f32 %v1128, %v1131
  %vm1133 = vweird.f32 %v1127
  %vm1134 = vweird.f32 %v1128
  %vm1135 = vmor %vm1133, %vm1134
  %v1136 = vsel %vm1135, %v1128, %v1132
  %v1137 = vand.u32 2147483647, %v1127
  %vm1138 = vcmp.eq.f32.partialorder %v1137, 8.507059e+37
  %v1139 = vand.u32 %v1127, 2147483648
  %v1140 = vor.u32 1.1754944e-38, %v1139
  %v1141 = vsel %vm1138, %v1140, %v1136
  %v1142 = vmul.f32 1.0, %v1141
  %v1143 = vmul.f32 %v1080, %v993
  %v1144 = vmul.f32 %v1040, %v1102
  %v1145 = vadd.f32 %v1143, %v1144
  %v1146 = vtanh.pop %v1145
  %v1147 = vmul.f32 %v1142, %v1146
  %s1148 = scalar_lea.vmem %s0, 224
  %v1149 = vld [vmem:[%s1148] sm:$0xff]
  %v1150 = vld [vmem:[%s1148 + $0x8] sm:$0xff]
  %v1151 = vld [vmem:[%s1148 + $0x10] sm:$0xff]
  %v1152 = vld [vmem:[%s1148 + $0x18] sm:$0xff]
  %1153 = vmatpush.msra.mxu0 %v40
  %1154 = vmatpush.msra.mxu0 %v39
  %1155 = vmatpush.msra.mxu0 %v38
  %1156 = vmatpush.msra.mxu0 %v37
  %1157 = vmatpush.msra.mxu0 %v36
  %1158 = vmatpush.msra.mxu0 %v35
  %1159 = vmatpush.msra.mxu0 %v34
  %1160 = vmatpush.msra.mxu0 %v33
  %1161 = vmatpush.msra.mxu0 %v32
  %1162 = vmatpush.msra.mxu0 %v31
  %1163 = vmatpush.msra.mxu0 %v30
  %1164 = vmatpush.msra.mxu0 %v29
  %1165 = vmatpush.msra.mxu0 %v28
  %1166 = vmatpush.msra.mxu0 %v27
  %1167 = vmatpush.msra.mxu0 %v26
  %1168 = vmatpush.msra.mxu0 %v25
  %1169 = vmatmul.f32.gmra.mxu0 %v1147
  %v1170 = vpop.f32.mrf.mxu0
  %v1171 = vadd.f32 0.0, %v1170
  %1172 = vdwg.mxu0
  %v1173 = vadd.f32 %v1149, %v1171
  %v1174 = vxor.u32 %v1173, 2147483648
  %v1175 = vmul.f32 %v1174, 1.442695
  %v1176 = vpow.pop %v1175
  %v1177 = vadd.f32 %v1176, 1.0
  %v1178 = vrcp.pop %v1177
  %v1179 = vmul.f32 %v1177, %v1178
  %v1180 = vsub.f32 1.0, %v1179
  %v1181 = vmul.f32 %v1178, %v1180
  %v1182 = vadd.f32 %v1178, %v1181
  %vm1183 = vweird.f32 %v1177
  %vm1184 = vweird.f32 %v1178
  %vm1185 = vmor %vm1183, %vm1184
  %v1186 = vsel %vm1185, %v1178, %v1182
  %v1187 = vand.u32 2147483647, %v1177
  %vm1188 = vcmp.eq.f32.partialorder %v1187, 8.507059e+37
  %v1189 = vand.u32 %v1177, 2147483648
  %v1190 = vor.u32 1.1754944e-38, %v1189
  %v1191 = vsel %vm1188, %v1190, %v1186
  %v1192 = vmul.f32 1.0, %v1191
  %1193 = vmatpush.msra.mxu0 %v96
  %1194 = vmatpush.msra.mxu0 %v95
  %1195 = vmatpush.msra.mxu0 %v94
  %1196 = vmatpush.msra.mxu0 %v93
  %1197 = vmatpush.msra.mxu0 %v92
  %1198 = vmatpush.msra.mxu0 %v91
  %1199 = vmatpush.msra.mxu0 %v90
  %1200 = vmatpush.msra.mxu0 %v89
  %1201 = vmatpush.msra.mxu0 %v88
  %1202 = vmatpush.msra.mxu0 %v87
  %1203 = vmatpush.msra.mxu0 %v86
  %1204 = vmatpush.msra.mxu0 %v85
  %1205 = vmatpush.msra.mxu0 %v84
  %1206 = vmatpush.msra.mxu0 %v83
  %1207 = vmatpush.msra.mxu0 %v82
  %1208 = vmatpush.msra.mxu0 %v81
  %1209 = vmatmul.f32.gmra.mxu0 %v1147
  %v1210 = vpop.f32.mrf.mxu0
  %v1211 = vadd.f32 0.0, %v1210
  %1212 = vdwg.mxu0
  %v1213 = vadd.f32 %v1150, %v1211
  %v1214 = vxor.u32 %v1213, 2147483648
  %v1215 = vmul.f32 %v1214, 1.442695
  %v1216 = vpow.pop %v1215
  %v1217 = vadd.f32 %v1216, 1.0
  %v1218 = vrcp.pop %v1217
  %v1219 = vmul.f32 %v1217, %v1218
  %v1220 = vsub.f32 1.0, %v1219
  %v1221 = vmul.f32 %v1218, %v1220
  %v1222 = vadd.f32 %v1218, %v1221
  %vm1223 = vweird.f32 %v1217
  %vm1224 = vweird.f32 %v1218
  %vm1225 = vmor %vm1223, %vm1224
  %v1226 = vsel %vm1225, %v1218, %v1222
  %v1227 = vand.u32 2147483647, %v1217
  %vm1228 = vcmp.eq.f32.partialorder %v1227, 8.507059e+37
  %v1229 = vand.u32 %v1217, 2147483648
  %v1230 = vor.u32 1.1754944e-38, %v1229
  %v1231 = vsel %vm1228, %v1230, %v1226
  %v1232 = vmul.f32 1.0, %v1231
  %1233 = vmatpush.msra.mxu0 %v152
  %1234 = vmatpush.msra.mxu0 %v151
  %1235 = vmatpush.msra.mxu0 %v150
  %1236 = vmatpush.msra.mxu0 %v149
  %1237 = vmatpush.msra.mxu0 %v148
  %1238 = vmatpush.msra.mxu0 %v147
  %1239 = vmatpush.msra.mxu0 %v146
  %1240 = vmatpush.msra.mxu0 %v145
  %1241 = vmatpush.msra.mxu0 %v144
  %1242 = vmatpush.msra.mxu0 %v143
  %1243 = vmatpush.msra.mxu0 %v142
  %1244 = vmatpush.msra.mxu0 %v141
  %1245 = vmatpush.msra.mxu0 %v140
  %1246 = vmatpush.msra.mxu0 %v139
  %1247 = vmatpush.msra.mxu0 %v138
  %1248 = vmatpush.msra.mxu0 %v137
  %1249 = vmatmul.f32.gmra.mxu0 %v1147
  %v1250 = vpop.f32.mrf.mxu0
  %v1251 = vadd.f32 0.0, %v1250
  %1252 = vdwg.mxu0
  %v1253 = vadd.f32 %v1151, %v1251
  %v1254 = vtanh.pop %v1253
  %1255 = vmatpush.msra.mxu0 %v190
  %1256 = vmatpush.msra.mxu0 %v189
  %1257 = vmatpush.msra.mxu0 %v188
  %1258 = vmatpush.msra.mxu0 %v187
  %1259 = vmatpush.msra.mxu0 %v186
  %1260 = vmatpush.msra.mxu0 %v185
  %1261 = vmatpush.msra.mxu0 %v184
  %1262 = vmatpush.msra.mxu0 %v183
  %1263 = vmatpush.msra.mxu0 %v182
  %1264 = vmatpush.msra.mxu0 %v181
  %1265 = vmatpush.msra.mxu0 %v180
  %1266 = vmatpush.msra.mxu0 %v179
  %1267 = vmatpush.msra.mxu0 %v178
  %1268 = vmatpush.msra.mxu0 %v177
  %1269 = vmatpush.msra.mxu0 %v176
  %1270 = vmatpush.msra.mxu0 %v175
  %1271 = vmatmul.f32.gmra.mxu0 %v1147
  %v1272 = vpop.f32.mrf.mxu0
  %v1273 = vadd.f32 0.0, %v1272
  %1274 = vdwg.mxu0
  %v1275 = vadd.f32 %v1152, %v1273
  %v1276 = vxor.u32 %v1275, 2147483648
  %v1277 = vmul.f32 %v1276, 1.442695
  %v1278 = vpow.pop %v1277
  %v1279 = vadd.f32 %v1278, 1.0
  %v1280 = vrcp.pop %v1279
  %v1281 = vmul.f32 %v1279, %v1280
  %v1282 = vsub.f32 1.0, %v1281
  %v1283 = vmul.f32 %v1280, %v1282
  %v1284 = vadd.f32 %v1280, %v1283
  %vm1285 = vweird.f32 %v1279
  %vm1286 = vweird.f32 %v1280
  %vm1287 = vmor %vm1285, %vm1286
  %v1288 = vsel %vm1287, %v1280, %v1284
  %v1289 = vand.u32 2147483647, %v1279
  %vm1290 = vcmp.eq.f32.partialorder %v1289, 8.507059e+37
  %v1291 = vand.u32 %v1279, 2147483648
  %v1292 = vor.u32 1.1754944e-38, %v1291
  %v1293 = vsel %vm1290, %v1292, %v1288
  %v1294 = vmul.f32 1.0, %v1293
  %v1295 = vmul.f32 %v1232, %v1145
  %v1296 = vmul.f32 %v1192, %v1254
  %v1297 = vadd.f32 %v1295, %v1296
  %v1298 = vtanh.pop %v1297
  %v1299 = vmul.f32 %v1294, %v1298
  %1300 = vst [vmem:[%s2] sm:$0xff] %v1299
  %1301 = vst [vmem:[%s3] sm:$0xff] %v1297
  // Predicated region
  $region14: #{lstm_forward.1} parent=0 // pred_check
    _
  $region15: #{lstm_forward.1} parent=0 // pred_check_branch
    %1303 = sbr.rel (0) target = $region17
  $region16: #{lstm_forward.1} parent=0 // pred_region
    _
  $region17: #{lstm_forward.1} parent=0 // pred_fallthru
    _
  // Predicated region
  $region18: #{lstm_forward.1} parent=0 // pred_check
    _
  $region19: #{lstm_forward.1} parent=0 // pred_check_branch
    %1305 = sbr.rel (0) target = $region21
  $region20: #{lstm_forward.1} parent=0 // pred_region
    _
  $region21: #{lstm_forward.1} parent=0 // pred_fallthru
    _
  // Predicated region
  $region22: #{lstm_forward.1} parent=0 // pred_check
    _
  $region23: #{lstm_forward.1} parent=0 // pred_check_branch
    %1307 = sbr.rel (0) target = $region25
  $region24: #{lstm_forward.1} parent=0 // pred_region
    _
  $region25: #{lstm_forward.1} parent=0 // pred_fallthru
    _
  // Predicated region
  $region26: #{lstm_forward.1} parent=0 // pred_check
    _
  $region27: #{lstm_forward.1} parent=0 // pred_check_branch
    %1309 = sbr.rel (0) target = $region29
  $region28: #{lstm_forward.1} parent=0 // pred_region
    _
  $region29: #{lstm_forward.1} parent=0 // pred_fallthru
    _

</llo_original>
